<compile_context>
chip_gen: v7x
topology: tpu7x:2x2x1
jax: 0.10.0
libtpu: 0.0.40
codegen_flags: <defaults>
</compile_context>

<pallas_src>
import jax
import jax.numpy as jnp
from jax.experimental import pallas as pl
from jax.experimental.pallas import tpu as pltpu

EMBED = 256
HIDDEN = 128


def make_encoder_lstm_kernel(T, B, H):
    """Builds a single-invocation LSTM kernel for a (T, B) problem size."""

    def kernel(x_ref, wih_ref, whh_ref, b_ref, out_ref):
        # x_ref   : (T*B, E)  time-major flattened embedded inputs (row = t*B + b)
        # wih_ref : (E, 4H)   input->gates weights, gate order [i, f, o, g]
        # whh_ref : (H, 4H)   hidden->gates weights, gate order [i, f, o, g]
        # b_ref   : (1, 4H)   b_ih + b_hh, gate order [i, f, o, g]
        # out_ref : (B, T, H) batch-first output sequence

        # Hoisted input projection: one big MXU matmul for all timesteps.
        z_in = (jnp.dot(x_ref[...], wih_ref[...],
                        preferred_element_type=jnp.float32)
                + b_ref[...])                                   # (T*B, 4H)

        whh = whh_ref[...]                                      # (H, 4H)
        h = jnp.zeros((B, H), jnp.float32)
        c = jnp.zeros((B, H), jnp.float32)

        # Fully unrolled recurrence (T is small & static); only the small
        # (B,H) x (H,4H) recurrent dot + elementwise gates sit on the serial path.
        for t in range(T):
            z = (z_in[t * B:(t + 1) * B, :]
                 + jnp.dot(h, whh, preferred_element_type=jnp.float32))  # (B,4H)

            sig = jax.nn.sigmoid(z[:, :3 * H])   # one contiguous sigmoid: i,f,o
            i_g = sig[:, 0 * H:1 * H]
            f_g = sig[:, 1 * H:2 * H]
            o_g = sig[:, 2 * H:3 * H]
            g_g = jnp.tanh(z[:, 3 * H:4 * H])

            c = f_g * c + i_g * g_g
            h = o_g * jnp.tanh(c)

            out_ref[:, t, :] = h.astype(out_ref.dtype)

    return kernel


def _permute_gates_ifog(w):
    """Reorder PyTorch's fused gate dim [i, f, g, o] -> [i, f, o, g] (axis 0)."""
    i, f, g, o = jnp.split(w, 4, axis=0)
    return jnp.concatenate([i, f, o, g], axis=0)


def encoder_forward(words, embedding, w_ih, w_hh, b_ih, b_hh):
    """Reproduces Encoder.forward(words): returns the LSTM output (B, T, H)."""
    B, T = words.shape
    E = embedding.shape[1]
    H = w_hh.shape[1]

    # Embedding lookup (data-dependent HBM gather) stays in plain JAX, but is
    # done directly in time-major flattened order so no activation transpose
    # ever touches HBM: row t*B + b == embedding[words[b, t]].
    flat_idx_tm = words.T.reshape(-1)                       # (T*B,) int32
    x_tm = jnp.take(embedding, flat_idx_tm, axis=0)         # (T*B, E) f32

    # Pre-transpose / permute the fused gate params once.
    wih_t = _permute_gates_ifog(w_ih).T                     # (E, 4H)
    whh_t = _permute_gates_ifog(w_hh).T                     # (H, 4H)
    bias = _permute_gates_ifog(b_ih + b_hh).reshape(1, 4 * H)  # (1, 4H)

    vmem = pl.BlockSpec(memory_space=pltpu.MemorySpace.VMEM)

    out = pl.pallas_call(
        make_encoder_lstm_kernel(T, B, H),
        out_shape=jax.ShapeDtypeStruct((B, T, H), jnp.float32),
        in_specs=[vmem, vmem, vmem, vmem],
        out_specs=vmem,
    )(x_tm, wih_t, whh_t, bias)

    return out                                              # (B, T, H)


def lstm_reference(x, w_ih, w_hh, b_ih, b_hh):
    """Pure-JAX reference matching torch.nn.LSTM (batch_first, zero init),
    using the ORIGINAL (unpermuted) PyTorch parameters."""
    B, T, E = x.shape
    H = w_hh.shape[1]
    h = jnp.zeros((B, H), jnp.float32)
    c = jnp.zeros((B, H), jnp.float32)

    def step(carry, x_t):
        h, c = carry
        z = x_t @ w_ih.T + h @ w_hh.T + b_ih + b_hh
        i = jax.nn.sigmoid(z[:, 0 * H:1 * H])
        f = jax.nn.sigmoid(z[:, 1 * H:2 * H])
        g = jnp.tanh(z[:, 2 * H:3 * H])
        o = jax.nn.sigmoid(z[:, 3 * H:4 * H])
        c = f * c + i * g
        h = o * jnp.tanh(c)
        return (h, c), h

    _, hs = jax.lax.scan(step, (h, c), jnp.transpose(x, (1, 0, 2)))
    return jnp.transpose(hs, (1, 0, 2))


if __name__ == "__main__":
    key = jax.random.PRNGKey(0)
    k_emb, k_ih, k_hh, k_bih, k_bhh, k_words = jax.random.split(key, 6)

    word_size = 50     # vocabulary size
    B, T = 2, 8        # batch, sequence length
    E, H = EMBED, HIDDEN

    # Deterministic parameter init (shapes follow nn.Embedding / nn.LSTM).
    embedding = jax.random.normal(k_emb, (word_size, E), jnp.float32)
    bound = 1.0 / jnp.sqrt(H)
    w_ih = jax.random.uniform(k_ih, (4 * H, E), jnp.float32, -bound, bound)
    w_hh = jax.random.uniform(k_hh, (4 * H, H), jnp.float32, -bound, bound)
    b_ih = jax.random.uniform(k_bih, (4 * H,), jnp.float32, -bound, bound)
    b_hh = jax.random.uniform(k_bhh, (4 * H,), jnp.float32, -bound, bound)

    words = jax.random.randint(k_words, (B, T), 0, word_size, jnp.int32)

    out = encoder_forward(words, embedding, w_ih, w_hh, b_ih, b_hh)
    out = jax.block_until_ready(out)

    # Sanity check against a pure-JAX LSTM reference (original gate order).
    x_emb = jnp.take(embedding, words, axis=0)
    ref = lstm_reference(x_emb, w_ih, w_hh, b_ih, b_hh)
    assert out.shape == (B, T, H)
    assert jnp.allclose(out, ref, atol=2e-5, rtol=2e-5)

    print("KERNEL_OK")
</pallas_src>

<mosaic_0001>
module attributes {stable_mosaic.version = 11 : i64} {
  func.func @kernel(%arg0: memref<16x256xf32, #tpu.memory_space<vmem>>, %arg1: memref<256x512xf32, #tpu.memory_space<vmem>>, %arg2: memref<128x512xf32, #tpu.memory_space<vmem>>, %arg3: memref<1x512xf32, #tpu.memory_space<vmem>>, %arg4: memref<2x8x128xf32, #tpu.memory_space<vmem>>) attributes {dimension_semantics = [], scalar_prefetch = 0 : i64, scratch_operands = 0 : i64, tpu.core_type = #tpu.core_type<tc>} {
    %c0 = arith.constant 0 : index
    %c0_0 = arith.constant 0 : index
    %0 = vector.load %arg0[%c0, %c0_0] : memref<16x256xf32, #tpu.memory_space<vmem>>, vector<16x256xf32>
    %c0_1 = arith.constant 0 : index
    %c0_2 = arith.constant 0 : index
    %1 = vector.load %arg1[%c0_1, %c0_2] : memref<256x512xf32, #tpu.memory_space<vmem>>, vector<256x512xf32>
    %cst = arith.constant dense<0.000000e+00> : vector<16x512xf32>
    %2 = tpu.matmul %0, %1, %cst {dimension_numbers = #tpu.dot_dimension_numbers<[1], [0], [0], [1], [0, 0, 1, 1], [], []>} : vector<16x256xf32>, vector<256x512xf32>, vector<16x512xf32> -> vector<16x512xf32>
    %c0_3 = arith.constant 0 : index
    %c0_4 = arith.constant 0 : index
    %3 = vector.load %arg3[%c0_3, %c0_4] : memref<1x512xf32, #tpu.memory_space<vmem>>, vector<1x512xf32>
    %4 = vector.broadcast %3 : vector<1x512xf32> to vector<16x512xf32>
    %5 = arith.addf %2, %4 : vector<16x512xf32>
    %c0_5 = arith.constant 0 : index
    %c0_6 = arith.constant 0 : index
    %6 = vector.load %arg2[%c0_5, %c0_6] : memref<128x512xf32, #tpu.memory_space<vmem>>, vector<128x512xf32>
    %cst_7 = arith.constant 0.000000e+00 : f32
    %7 = vector.broadcast %cst_7 : f32 to vector<2x128xf32>
    %cst_8 = arith.constant 0.000000e+00 : f32
    %8 = vector.broadcast %cst_8 : f32 to vector<2x128xf32>
    %9 = vector.extract_strided_slice %5 {offsets = [0, 0], sizes = [2, 512], strides = [1, 1]} : vector<16x512xf32> to vector<2x512xf32>
    %cst_9 = arith.constant dense<0.000000e+00> : vector<2x512xf32>
    %10 = tpu.matmul %7, %6, %cst_9 {dimension_numbers = #tpu.dot_dimension_numbers<[1], [0], [0], [1], [0, 0, 1, 1], [], []>} : vector<2x128xf32>, vector<128x512xf32>, vector<2x512xf32> -> vector<2x512xf32>
    %11 = arith.addf %9, %10 : vector<2x512xf32>
    %12 = vector.extract_strided_slice %11 {offsets = [0, 0], sizes = [2, 384], strides = [1, 1]} : vector<2x512xf32> to vector<2x384xf32>
    %13 = arith.negf %12 : vector<2x384xf32>
    %14 = math.exp %13 : vector<2x384xf32>
    %cst_10 = arith.constant 1.000000e+00 : f32
    %15 = vector.broadcast %cst_10 : f32 to vector<2x384xf32>
    %16 = arith.addf %15, %14 : vector<2x384xf32>
    %17 = arith.divf %15, %16 : vector<2x384xf32>
    %18 = vector.extract_strided_slice %17 {offsets = [0, 0], sizes = [2, 128], strides = [1, 1]} : vector<2x384xf32> to vector<2x128xf32>
    %19 = vector.extract_strided_slice %17 {offsets = [0, 128], sizes = [2, 128], strides = [1, 1]} : vector<2x384xf32> to vector<2x128xf32>
    %20 = vector.extract_strided_slice %17 {offsets = [0, 256], sizes = [2, 128], strides = [1, 1]} : vector<2x384xf32> to vector<2x128xf32>
    %21 = vector.extract_strided_slice %11 {offsets = [0, 384], sizes = [2, 128], strides = [1, 1]} : vector<2x512xf32> to vector<2x128xf32>
    %22 = math.tanh %21 : vector<2x128xf32>
    %23 = arith.mulf %19, %8 : vector<2x128xf32>
    %24 = arith.mulf %18, %22 : vector<2x128xf32>
    %25 = arith.addf %23, %24 : vector<2x128xf32>
    %26 = math.tanh %25 : vector<2x128xf32>
    %27 = arith.mulf %20, %26 : vector<2x128xf32>
    %c0_11 = arith.constant 0 : index
    %c0_12 = arith.constant 0 : index
    %c0_13 = arith.constant 0 : index
    %28 = vector.load %arg4[%c0_11, %c0_12, %c0_13] : memref<2x8x128xf32, #tpu.memory_space<vmem>>, vector<2x1x128xf32>
    %29 = vector.shape_cast %28 : vector<2x1x128xf32> to vector<2x128xf32>
    %30 = vector.shape_cast %27 : vector<2x128xf32> to vector<2x1x128xf32>
    tpu.vector_store %arg4[%c0_11, %c0_12, %c0_13], %30 {strides = array<i32>} : memref<2x8x128xf32, #tpu.memory_space<vmem>>, vector<2x1x128xf32>,
    %31 = vector.extract_strided_slice %5 {offsets = [2, 0], sizes = [2, 512], strides = [1, 1]} : vector<16x512xf32> to vector<2x512xf32>
    %cst_14 = arith.constant dense<0.000000e+00> : vector<2x512xf32>
    %32 = tpu.matmul %27, %6, %cst_14 {dimension_numbers = #tpu.dot_dimension_numbers<[1], [0], [0], [1], [0, 0, 1, 1], [], []>} : vector<2x128xf32>, vector<128x512xf32>, vector<2x512xf32> -> vector<2x512xf32>
    %33 = arith.addf %31, %32 : vector<2x512xf32>
    %34 = vector.extract_strided_slice %33 {offsets = [0, 0], sizes = [2, 384], strides = [1, 1]} : vector<2x512xf32> to vector<2x384xf32>
    %35 = arith.negf %34 : vector<2x384xf32>
    %36 = math.exp %35 : vector<2x384xf32>
    %cst_15 = arith.constant 1.000000e+00 : f32
    %37 = vector.broadcast %cst_15 : f32 to vector<2x384xf32>
    %38 = arith.addf %37, %36 : vector<2x384xf32>
    %39 = arith.divf %37, %38 : vector<2x384xf32>
    %40 = vector.extract_strided_slice %39 {offsets = [0, 0], sizes = [2, 128], strides = [1, 1]} : vector<2x384xf32> to vector<2x128xf32>
    %41 = vector.extract_strided_slice %39 {offsets = [0, 128], sizes = [2, 128], strides = [1, 1]} : vector<2x384xf32> to vector<2x128xf32>
    %42 = vector.extract_strided_slice %39 {offsets = [0, 256], sizes = [2, 128], strides = [1, 1]} : vector<2x384xf32> to vector<2x128xf32>
    %43 = vector.extract_strided_slice %33 {offsets = [0, 384], sizes = [2, 128], strides = [1, 1]} : vector<2x512xf32> to vector<2x128xf32>
    %44 = math.tanh %43 : vector<2x128xf32>
    %45 = arith.mulf %41, %25 : vector<2x128xf32>
    %46 = arith.mulf %40, %44 : vector<2x128xf32>
    %47 = arith.addf %45, %46 : vector<2x128xf32>
    %48 = math.tanh %47 : vector<2x128xf32>
    %49 = arith.mulf %42, %48 : vector<2x128xf32>
    %c0_16 = arith.constant 0 : index
    %c1 = arith.constant 1 : index
    %c0_17 = arith.constant 0 : index
    %50 = vector.load %arg4[%c0_16, %c1, %c0_17] : memref<2x8x128xf32, #tpu.memory_space<vmem>>, vector<2x1x128xf32>
    %51 = vector.shape_cast %50 : vector<2x1x128xf32> to vector<2x128xf32>
    %52 = vector.shape_cast %49 : vector<2x128xf32> to vector<2x1x128xf32>
    tpu.vector_store %arg4[%c0_16, %c1, %c0_17], %52 {strides = array<i32>} : memref<2x8x128xf32, #tpu.memory_space<vmem>>, vector<2x1x128xf32>,
    %53 = vector.extract_strided_slice %5 {offsets = [4, 0], sizes = [2, 512], strides = [1, 1]} : vector<16x512xf32> to vector<2x512xf32>
    %cst_18 = arith.constant dense<0.000000e+00> : vector<2x512xf32>
    %54 = tpu.matmul %49, %6, %cst_18 {dimension_numbers = #tpu.dot_dimension_numbers<[1], [0], [0], [1], [0, 0, 1, 1], [], []>} : vector<2x128xf32>, vector<128x512xf32>, vector<2x512xf32> -> vector<2x512xf32>
    %55 = arith.addf %53, %54 : vector<2x512xf32>
    %56 = vector.extract_strided_slice %55 {offsets = [0, 0], sizes = [2, 384], strides = [1, 1]} : vector<2x512xf32> to vector<2x384xf32>
    %57 = arith.negf %56 : vector<2x384xf32>
    %58 = math.exp %57 : vector<2x384xf32>
    %cst_19 = arith.constant 1.000000e+00 : f32
    %59 = vector.broadcast %cst_19 : f32 to vector<2x384xf32>
    %60 = arith.addf %59, %58 : vector<2x384xf32>
    %61 = arith.divf %59, %60 : vector<2x384xf32>
    %62 = vector.extract_strided_slice %61 {offsets = [0, 0], sizes = [2, 128], strides = [1, 1]} : vector<2x384xf32> to vector<2x128xf32>
    %63 = vector.extract_strided_slice %61 {offsets = [0, 128], sizes = [2, 128], strides = [1, 1]} : vector<2x384xf32> to vector<2x128xf32>
    %64 = vector.extract_strided_slice %61 {offsets = [0, 256], sizes = [2, 128], strides = [1, 1]} : vector<2x384xf32> to vector<2x128xf32>
    %65 = vector.extract_strided_slice %55 {offsets = [0, 384], sizes = [2, 128], strides = [1, 1]} : vector<2x512xf32> to vector<2x128xf32>
    %66 = math.tanh %65 : vector<2x128xf32>
    %67 = arith.mulf %63, %47 : vector<2x128xf32>
    %68 = arith.mulf %62, %66 : vector<2x128xf32>
    %69 = arith.addf %67, %68 : vector<2x128xf32>
    %70 = math.tanh %69 : vector<2x128xf32>
    %71 = arith.mulf %64, %70 : vector<2x128xf32>
    %c0_20 = arith.constant 0 : index
    %c2 = arith.constant 2 : index
    %c0_21 = arith.constant 0 : index
    %72 = vector.load %arg4[%c0_20, %c2, %c0_21] : memref<2x8x128xf32, #tpu.memory_space<vmem>>, vector<2x1x128xf32>
    %73 = vector.shape_cast %72 : vector<2x1x128xf32> to vector<2x128xf32>
    %74 = vector.shape_cast %71 : vector<2x128xf32> to vector<2x1x128xf32>
    tpu.vector_store %arg4[%c0_20, %c2, %c0_21], %74 {strides = array<i32>} : memref<2x8x128xf32, #tpu.memory_space<vmem>>, vector<2x1x128xf32>,
    %75 = vector.extract_strided_slice %5 {offsets = [6, 0], sizes = [2, 512], strides = [1, 1]} : vector<16x512xf32> to vector<2x512xf32>
    %cst_22 = arith.constant dense<0.000000e+00> : vector<2x512xf32>
    %76 = tpu.matmul %71, %6, %cst_22 {dimension_numbers = #tpu.dot_dimension_numbers<[1], [0], [0], [1], [0, 0, 1, 1], [], []>} : vector<2x128xf32>, vector<128x512xf32>, vector<2x512xf32> -> vector<2x512xf32>
    %77 = arith.addf %75, %76 : vector<2x512xf32>
    %78 = vector.extract_strided_slice %77 {offsets = [0, 0], sizes = [2, 384], strides = [1, 1]} : vector<2x512xf32> to vector<2x384xf32>
    %79 = arith.negf %78 : vector<2x384xf32>
    %80 = math.exp %79 : vector<2x384xf32>
    %cst_23 = arith.constant 1.000000e+00 : f32
    %81 = vector.broadcast %cst_23 : f32 to vector<2x384xf32>
    %82 = arith.addf %81, %80 : vector<2x384xf32>
    %83 = arith.divf %81, %82 : vector<2x384xf32>
    %84 = vector.extract_strided_slice %83 {offsets = [0, 0], sizes = [2, 128], strides = [1, 1]} : vector<2x384xf32> to vector<2x128xf32>
    %85 = vector.extract_strided_slice %83 {offsets = [0, 128], sizes = [2, 128], strides = [1, 1]} : vector<2x384xf32> to vector<2x128xf32>
    %86 = vector.extract_strided_slice %83 {offsets = [0, 256], sizes = [2, 128], strides = [1, 1]} : vector<2x384xf32> to vector<2x128xf32>
    %87 = vector.extract_strided_slice %77 {offsets = [0, 384], sizes = [2, 128], strides = [1, 1]} : vector<2x512xf32> to vector<2x128xf32>
    %88 = math.tanh %87 : vector<2x128xf32>
    %89 = arith.mulf %85, %69 : vector<2x128xf32>
    %90 = arith.mulf %84, %88 : vector<2x128xf32>
    %91 = arith.addf %89, %90 : vector<2x128xf32>
    %92 = math.tanh %91 : vector<2x128xf32>
    %93 = arith.mulf %86, %92 : vector<2x128xf32>
    %c0_24 = arith.constant 0 : index
    %c3 = arith.constant 3 : index
    %c0_25 = arith.constant 0 : index
    %94 = vector.load %arg4[%c0_24, %c3, %c0_25] : memref<2x8x128xf32, #tpu.memory_space<vmem>>, vector<2x1x128xf32>
    %95 = vector.shape_cast %94 : vector<2x1x128xf32> to vector<2x128xf32>
    %96 = vector.shape_cast %93 : vector<2x128xf32> to vector<2x1x128xf32>
    tpu.vector_store %arg4[%c0_24, %c3, %c0_25], %96 {strides = array<i32>} : memref<2x8x128xf32, #tpu.memory_space<vmem>>, vector<2x1x128xf32>,
    %97 = vector.extract_strided_slice %5 {offsets = [8, 0], sizes = [2, 512], strides = [1, 1]} : vector<16x512xf32> to vector<2x512xf32>
    %cst_26 = arith.constant dense<0.000000e+00> : vector<2x512xf32>
    %98 = tpu.matmul %93, %6, %cst_26 {dimension_numbers = #tpu.dot_dimension_numbers<[1], [0], [0], [1], [0, 0, 1, 1], [], []>} : vector<2x128xf32>, vector<128x512xf32>, vector<2x512xf32> -> vector<2x512xf32>
    %99 = arith.addf %97, %98 : vector<2x512xf32>
    %100 = vector.extract_strided_slice %99 {offsets = [0, 0], sizes = [2, 384], strides = [1, 1]} : vector<2x512xf32> to vector<2x384xf32>
    %101 = arith.negf %100 : vector<2x384xf32>
    %102 = math.exp %101 : vector<2x384xf32>
    %cst_27 = arith.constant 1.000000e+00 : f32
    %103 = vector.broadcast %cst_27 : f32 to vector<2x384xf32>
    %104 = arith.addf %103, %102 : vector<2x384xf32>
    %105 = arith.divf %103, %104 : vector<2x384xf32>
    %106 = vector.extract_strided_slice %105 {offsets = [0, 0], sizes = [2, 128], strides = [1, 1]} : vector<2x384xf32> to vector<2x128xf32>
    %107 = vector.extract_strided_slice %105 {offsets = [0, 128], sizes = [2, 128], strides = [1, 1]} : vector<2x384xf32> to vector<2x128xf32>
    %108 = vector.extract_strided_slice %105 {offsets = [0, 256], sizes = [2, 128], strides = [1, 1]} : vector<2x384xf32> to vector<2x128xf32>
    %109 = vector.extract_strided_slice %99 {offsets = [0, 384], sizes = [2, 128], strides = [1, 1]} : vector<2x512xf32> to vector<2x128xf32>
    %110 = math.tanh %109 : vector<2x128xf32>
    %111 = arith.mulf %107, %91 : vector<2x128xf32>
    %112 = arith.mulf %106, %110 : vector<2x128xf32>
    %113 = arith.addf %111, %112 : vector<2x128xf32>
    %114 = math.tanh %113 : vector<2x128xf32>
    %115 = arith.mulf %108, %114 : vector<2x128xf32>
    %c0_28 = arith.constant 0 : index
    %c4 = arith.constant 4 : index
    %c0_29 = arith.constant 0 : index
    %116 = vector.load %arg4[%c0_28, %c4, %c0_29] : memref<2x8x128xf32, #tpu.memory_space<vmem>>, vector<2x1x128xf32>
    %117 = vector.shape_cast %116 : vector<2x1x128xf32> to vector<2x128xf32>
    %118 = vector.shape_cast %115 : vector<2x128xf32> to vector<2x1x128xf32>
    tpu.vector_store %arg4[%c0_28, %c4, %c0_29], %118 {strides = array<i32>} : memref<2x8x128xf32, #tpu.memory_space<vmem>>, vector<2x1x128xf32>,
    %119 = vector.extract_strided_slice %5 {offsets = [10, 0], sizes = [2, 512], strides = [1, 1]} : vector<16x512xf32> to vector<2x512xf32>
    %cst_30 = arith.constant dense<0.000000e+00> : vector<2x512xf32>
    %120 = tpu.matmul %115, %6, %cst_30 {dimension_numbers = #tpu.dot_dimension_numbers<[1], [0], [0], [1], [0, 0, 1, 1], [], []>} : vector<2x128xf32>, vector<128x512xf32>, vector<2x512xf32> -> vector<2x512xf32>
    %121 = arith.addf %119, %120 : vector<2x512xf32>
    %122 = vector.extract_strided_slice %121 {offsets = [0, 0], sizes = [2, 384], strides = [1, 1]} : vector<2x512xf32> to vector<2x384xf32>
    %123 = arith.negf %122 : vector<2x384xf32>
    %124 = math.exp %123 : vector<2x384xf32>
    %cst_31 = arith.constant 1.000000e+00 : f32
    %125 = vector.broadcast %cst_31 : f32 to vector<2x384xf32>
    %126 = arith.addf %125, %124 : vector<2x384xf32>
    %127 = arith.divf %125, %126 : vector<2x384xf32>
    %128 = vector.extract_strided_slice %127 {offsets = [0, 0], sizes = [2, 128], strides = [1, 1]} : vector<2x384xf32> to vector<2x128xf32>
    %129 = vector.extract_strided_slice %127 {offsets = [0, 128], sizes = [2, 128], strides = [1, 1]} : vector<2x384xf32> to vector<2x128xf32>
    %130 = vector.extract_strided_slice %127 {offsets = [0, 256], sizes = [2, 128], strides = [1, 1]} : vector<2x384xf32> to vector<2x128xf32>
    %131 = vector.extract_strided_slice %121 {offsets = [0, 384], sizes = [2, 128], strides = [1, 1]} : vector<2x512xf32> to vector<2x128xf32>
    %132 = math.tanh %131 : vector<2x128xf32>
    %133 = arith.mulf %129, %113 : vector<2x128xf32>
    %134 = arith.mulf %128, %132 : vector<2x128xf32>
    %135 = arith.addf %133, %134 : vector<2x128xf32>
    %136 = math.tanh %135 : vector<2x128xf32>
    %137 = arith.mulf %130, %136 : vector<2x128xf32>
    %c0_32 = arith.constant 0 : index
    %c5 = arith.constant 5 : index
    %c0_33 = arith.constant 0 : index
    %138 = vector.load %arg4[%c0_32, %c5, %c0_33] : memref<2x8x128xf32, #tpu.memory_space<vmem>>, vector<2x1x128xf32>
    %139 = vector.shape_cast %138 : vector<2x1x128xf32> to vector<2x128xf32>
    %140 = vector.shape_cast %137 : vector<2x128xf32> to vector<2x1x128xf32>
    tpu.vector_store %arg4[%c0_32, %c5, %c0_33], %140 {strides = array<i32>} : memref<2x8x128xf32, #tpu.memory_space<vmem>>, vector<2x1x128xf32>,
    %141 = vector.extract_strided_slice %5 {offsets = [12, 0], sizes = [2, 512], strides = [1, 1]} : vector<16x512xf32> to vector<2x512xf32>
    %cst_34 = arith.constant dense<0.000000e+00> : vector<2x512xf32>
    %142 = tpu.matmul %137, %6, %cst_34 {dimension_numbers = #tpu.dot_dimension_numbers<[1], [0], [0], [1], [0, 0, 1, 1], [], []>} : vector<2x128xf32>, vector<128x512xf32>, vector<2x512xf32> -> vector<2x512xf32>
    %143 = arith.addf %141, %142 : vector<2x512xf32>
    %144 = vector.extract_strided_slice %143 {offsets = [0, 0], sizes = [2, 384], strides = [1, 1]} : vector<2x512xf32> to vector<2x384xf32>
    %145 = arith.negf %144 : vector<2x384xf32>
    %146 = math.exp %145 : vector<2x384xf32>
    %cst_35 = arith.constant 1.000000e+00 : f32
    %147 = vector.broadcast %cst_35 : f32 to vector<2x384xf32>
    %148 = arith.addf %147, %146 : vector<2x384xf32>
    %149 = arith.divf %147, %148 : vector<2x384xf32>
    %150 = vector.extract_strided_slice %149 {offsets = [0, 0], sizes = [2, 128], strides = [1, 1]} : vector<2x384xf32> to vector<2x128xf32>
    %151 = vector.extract_strided_slice %149 {offsets = [0, 128], sizes = [2, 128], strides = [1, 1]} : vector<2x384xf32> to vector<2x128xf32>
    %152 = vector.extract_strided_slice %149 {offsets = [0, 256], sizes = [2, 128], strides = [1, 1]} : vector<2x384xf32> to vector<2x128xf32>
    %153 = vector.extract_strided_slice %143 {offsets = [0, 384], sizes = [2, 128], strides = [1, 1]} : vector<2x512xf32> to vector<2x128xf32>
    %154 = math.tanh %153 : vector<2x128xf32>
    %155 = arith.mulf %151, %135 : vector<2x128xf32>
    %156 = arith.mulf %150, %154 : vector<2x128xf32>
    %157 = arith.addf %155, %156 : vector<2x128xf32>
    %158 = math.tanh %157 : vector<2x128xf32>
    %159 = arith.mulf %152, %158 : vector<2x128xf32>
    %c0_36 = arith.constant 0 : index
    %c6 = arith.constant 6 : index
    %c0_37 = arith.constant 0 : index
    %160 = vector.load %arg4[%c0_36, %c6, %c0_37] : memref<2x8x128xf32, #tpu.memory_space<vmem>>, vector<2x1x128xf32>
    %161 = vector.shape_cast %160 : vector<2x1x128xf32> to vector<2x128xf32>
    %162 = vector.shape_cast %159 : vector<2x128xf32> to vector<2x1x128xf32>
    tpu.vector_store %arg4[%c0_36, %c6, %c0_37], %162 {strides = array<i32>} : memref<2x8x128xf32, #tpu.memory_space<vmem>>, vector<2x1x128xf32>,
    %163 = vector.extract_strided_slice %5 {offsets = [14, 0], sizes = [2, 512], strides = [1, 1]} : vector<16x512xf32> to vector<2x512xf32>
    %cst_38 = arith.constant dense<0.000000e+00> : vector<2x512xf32>
    %164 = tpu.matmul %159, %6, %cst_38 {dimension_numbers = #tpu.dot_dimension_numbers<[1], [0], [0], [1], [0, 0, 1, 1], [], []>} : vector<2x128xf32>, vector<128x512xf32>, vector<2x512xf32> -> vector<2x512xf32>
    %165 = arith.addf %163, %164 : vector<2x512xf32>
    %166 = vector.extract_strided_slice %165 {offsets = [0, 0], sizes = [2, 384], strides = [1, 1]} : vector<2x512xf32> to vector<2x384xf32>
    %167 = arith.negf %166 : vector<2x384xf32>
    %168 = math.exp %167 : vector<2x384xf32>
    %cst_39 = arith.constant 1.000000e+00 : f32
    %169 = vector.broadcast %cst_39 : f32 to vector<2x384xf32>
    %170 = arith.addf %169, %168 : vector<2x384xf32>
    %171 = arith.divf %169, %170 : vector<2x384xf32>
    %172 = vector.extract_strided_slice %171 {offsets = [0, 0], sizes = [2, 128], strides = [1, 1]} : vector<2x384xf32> to vector<2x128xf32>
    %173 = vector.extract_strided_slice %171 {offsets = [0, 128], sizes = [2, 128], strides = [1, 1]} : vector<2x384xf32> to vector<2x128xf32>
    %174 = vector.extract_strided_slice %171 {offsets = [0, 256], sizes = [2, 128], strides = [1, 1]} : vector<2x384xf32> to vector<2x128xf32>
    %175 = vector.extract_strided_slice %165 {offsets = [0, 384], sizes = [2, 128], strides = [1, 1]} : vector<2x512xf32> to vector<2x128xf32>
    %176 = math.tanh %175 : vector<2x128xf32>
    %177 = arith.mulf %173, %157 : vector<2x128xf32>
    %178 = arith.mulf %172, %176 : vector<2x128xf32>
    %179 = arith.addf %177, %178 : vector<2x128xf32>
    %180 = math.tanh %179 : vector<2x128xf32>
    %181 = arith.mulf %174, %180 : vector<2x128xf32>
    %c0_40 = arith.constant 0 : index
    %c7 = arith.constant 7 : index
    %c0_41 = arith.constant 0 : index
    %182 = vector.load %arg4[%c0_40, %c7, %c0_41] : memref<2x8x128xf32, #tpu.memory_space<vmem>>, vector<2x1x128xf32>
    %183 = vector.shape_cast %182 : vector<2x1x128xf32> to vector<2x128xf32>
    %184 = vector.shape_cast %181 : vector<2x128xf32> to vector<2x1x128xf32>
    tpu.vector_store %arg4[%c0_40, %c7, %c0_41], %184 {strides = array<i32>} : memref<2x8x128xf32, #tpu.memory_space<vmem>>, vector<2x1x128xf32>,
    return
  }
}

</mosaic_0001>

<llo_original>
// kernel: tpu_custom_call.1
$region0: #{tpu_custom_call.1}
  #allocation0 [shape = 'u32[]', space=smem, size = 0x4, offset = 0x4, fixed_abs, tag = 'smem constant byte address 0x4 - core index']
  #allocation1 [shape = 'u32[144,128]{1,0:T(1,128)}', space=vmem, size = 0x12000, scoped, tag = 'internal scratch']
  %s0 = inlined_call_operand.hbm [shape: f32[16,256], index: 0, kind: input, shape index: {}]
  %s1 = inlined_call_operand.hbm [shape: f32[256,512], index: 1, kind: input, shape index: {}]
  %s2 = inlined_call_operand.hbm [shape: f32[128,512], index: 2, kind: input, shape index: {}]
  %s3 = inlined_call_operand.vmem [shape: f32[1,512], index: 3, kind: input, shape index: {}]
  %s4 = inlined_call_operand.hbm [shape: f32[2,8,128], index: 4, kind: output, shape index: {}]
  %s5 = sld [smem:[#allocation0]]
  $region38: #{tpu_custom_call.1} parent=0
    _
  %s7 = ssub.s32 1, %s5
  %s8 = scalar_select 0, %s7, %s5
  $region1: #{tpu_custom_call.1} parent=0
    #allocation2 [shape = 'u8[16384]{0}', space=vmem, size = 0x4000, scoped, tag = 'input window, operand 0, single buffered']
    #allocation3 [shape = 's32[1]{0}', space=sflag, size = 0x4, scoped, tag = 'scoped memory for tpu_custom_call.1']
    #allocation4 [shape = 's32[1]{0}', space=sflag, size = 0x4, scoped, tag = 'scoped memory for tpu_custom_call.1']
    #allocation5 [shape = 'u8[524288]{0}', space=vmem, size = 0x80000, scoped, tag = 'input window, operand 1, single buffered']
    #allocation6 [shape = 's32[1]{0}', space=sflag, size = 0x4, scoped, tag = 'scoped memory for tpu_custom_call.1']
    #allocation7 [shape = 'u8[262144]{0}', space=vmem, size = 0x40000, scoped, tag = 'input window, operand 2, single buffered']
    #allocation8 [shape = 'u8[8192]{0}', space=vmem, size = 0x2000, scoped, tag = 'output window, operand 0, single buffered']
    %9 = vsyncpa [#allocation3], 0
    %10 = vsyncpa [#allocation6], 0
    %11 = vsyncpa [#allocation4], 0
    // Predicated region
    $region2: #{tpu_custom_call.1} parent=1 // pred_check
      _
    $region3: #{tpu_custom_call.1} parent=1 // pred_check_branch
      %13 = sbr.rel (0) target = $region5
    $region4: #{tpu_custom_call.1} parent=1 // pred_region
      %s15 = ssub.s32 512, 512
      %16 = vsyncadd [#allocation3], %s15
      %s17 = sshll.u32 [#allocation2], 4
      %s18 = int_to_ptr.vmem [resolvable:$true] %s17
      %23 = dma.hbm_to_vmem [thread:$0]  %s0, 512, %s18, [#allocation3], 256, 256, 16
    $region5: #{tpu_custom_call.1} parent=1 // pred_fallthru
      _
    // Predicated region
    $region6: #{tpu_custom_call.1} parent=1 // pred_check
      _
    $region7: #{tpu_custom_call.1} parent=1 // pred_check_branch
      %25 = sbr.rel (0) target = $region9
    $region8: #{tpu_custom_call.1} parent=1 // pred_region
      %s27 = ssub.s32 16384, 16384
      %28 = vsyncadd [#allocation6], %s27
      %s29 = sshll.u32 [#allocation5], 4
      %s30 = int_to_ptr.vmem [resolvable:$true] %s29
      %35 = dma.hbm_to_vmem [thread:$0]  %s1, 16384, %s30, [#allocation6], 512, 512, 32
    $region9: #{tpu_custom_call.1} parent=1 // pred_fallthru
      _
    // Predicated region
    $region10: #{tpu_custom_call.1} parent=1 // pred_check
      _
    $region11: #{tpu_custom_call.1} parent=1 // pred_check_branch
      %37 = sbr.rel (0) target = $region13
    $region12: #{tpu_custom_call.1} parent=1 // pred_region
      %s39 = ssub.s32 8192, 8192
      %40 = vsyncadd [#allocation6], %s39
      %s41 = sshll.u32 [#allocation7], 4
      %s42 = int_to_ptr.vmem [resolvable:$true] %s41
      %47 = dma.hbm_to_vmem [thread:$0]  %s2, 8192, %s42, [#allocation6], 512, 512, 32
    $region13: #{tpu_custom_call.1} parent=1 // pred_fallthru
      _
    // Predicated region
    $region14: #{tpu_custom_call.1} parent=1 // pred_check
      _
    $region15: #{tpu_custom_call.1} parent=1 // pred_check_branch
      %49 = sbr.rel (0) target = $region17
    $region16: #{tpu_custom_call.1} parent=1 // pred_region
      _
    $region17: #{tpu_custom_call.1} parent=1 // pred_fallthru
      _
    // Predicated region
    $region18: #{tpu_custom_call.1} parent=1 // pred_check
      _
    $region19: #{tpu_custom_call.1} parent=1 // pred_check_branch
      %51 = sbr.rel (0) target = $region21
    $region20: #{tpu_custom_call.1} parent=1 // pred_region
      %52 = dma.done [#allocation3], 512
    $region21: #{tpu_custom_call.1} parent=1 // pred_fallthru
      _
    // Predicated region
    $region22: #{tpu_custom_call.1} parent=1 // pred_check
      _
    $region23: #{tpu_custom_call.1} parent=1 // pred_check_branch
      %54 = sbr.rel (0) target = $region25
    $region24: #{tpu_custom_call.1} parent=1 // pred_region
      %55 = dma.done [#allocation6], 16384
    $region25: #{tpu_custom_call.1} parent=1 // pred_fallthru
      _
    // Predicated region
    $region26: #{tpu_custom_call.1} parent=1 // pred_check
      _
    $region27: #{tpu_custom_call.1} parent=1 // pred_check_branch
      %57 = sbr.rel (0) target = $region29
    $region28: #{tpu_custom_call.1} parent=1 // pred_region
      %58 = dma.done [#allocation6], 8192
    $region29: #{tpu_custom_call.1} parent=1 // pred_fallthru
      _
    %v59 = vld [vmem:[#allocation2] sm:$0xff]
    %v60 = vld [vmem:[#allocation2 + $0x8] sm:$0xff]
    %v61 = vld [vmem:[#allocation2 + $0x10] sm:$0xff]
    %v62 = vld [vmem:[#allocation2 + $0x18] sm:$0xff]
    %v63 = vld [vmem:[#allocation5] sm:$0xff]
    %v64 = vld [vmem:[#allocation5 + $0x8] sm:$0xff]
    %v65 = vld [vmem:[#allocation5 + $0x10] sm:$0xff]
    %v66 = vld [vmem:[#allocation5 + $0x18] sm:$0xff]
    %v67 = vld [vmem:[#allocation5 + $0x20] sm:$0xff]
    %v68 = vld [vmem:[#allocation5 + $0x28] sm:$0xff]
    %v69 = vld [vmem:[#allocation5 + $0x30] sm:$0xff]
    %v70 = vld [vmem:[#allocation5 + $0x38] sm:$0xff]
    %v71 = vld [vmem:[#allocation5 + $0x40] sm:$0xff]
    %v72 = vld [vmem:[#allocation5 + $0x48] sm:$0xff]
    %v73 = vld [vmem:[#allocation5 + $0x50] sm:$0xff]
    %v74 = vld [vmem:[#allocation5 + $0x58] sm:$0xff]
    %v75 = vld [vmem:[#allocation5 + $0x60] sm:$0xff]
    %v76 = vld [vmem:[#allocation5 + $0x68] sm:$0xff]
    %v77 = vld [vmem:[#allocation5 + $0x70] sm:$0xff]
    %v78 = vld [vmem:[#allocation5 + $0x78] sm:$0xff]
    %v79 = vld [vmem:[#allocation5 + $0x80] sm:$0xff]
    %v80 = vld [vmem:[#allocation5 + $0x88] sm:$0xff]
    %v81 = vld [vmem:[#allocation5 + $0x90] sm:$0xff]
    %v82 = vld [vmem:[#allocation5 + $0x98] sm:$0xff]
    %v83 = vld [vmem:[#allocation5 + $0xa0] sm:$0xff]
    %v84 = vld [vmem:[#allocation5 + $0xa8] sm:$0xff]
    %v85 = vld [vmem:[#allocation5 + $0xb0] sm:$0xff]
    %v86 = vld [vmem:[#allocation5 + $0xb8] sm:$0xff]
    %v87 = vld [vmem:[#allocation5 + $0xc0] sm:$0xff]
    %v88 = vld [vmem:[#allocation5 + $0xc8] sm:$0xff]
    %v89 = vld [vmem:[#allocation5 + $0xd0] sm:$0xff]
    %v90 = vld [vmem:[#allocation5 + $0xd8] sm:$0xff]
    %v91 = vld [vmem:[#allocation5 + $0xe0] sm:$0xff]
    %v92 = vld [vmem:[#allocation5 + $0xe8] sm:$0xff]
    %v93 = vld [vmem:[#allocation5 + $0xf0] sm:$0xff]
    %v94 = vld [vmem:[#allocation5 + $0xf8] sm:$0xff]
    %v95 = vld [vmem:[#allocation5 + $0x100] sm:$0xff]
    %v96 = vld [vmem:[#allocation5 + $0x108] sm:$0xff]
    %v97 = vld [vmem:[#allocation5 + $0x110] sm:$0xff]
    %v98 = vld [vmem:[#allocation5 + $0x118] sm:$0xff]
    %v99 = vld [vmem:[#allocation5 + $0x120] sm:$0xff]
    %v100 = vld [vmem:[#allocation5 + $0x128] sm:$0xff]
    %v101 = vld [vmem:[#allocation5 + $0x130] sm:$0xff]
    %v102 = vld [vmem:[#allocation5 + $0x138] sm:$0xff]
    %v103 = vld [vmem:[#allocation5 + $0x140] sm:$0xff]
    %v104 = vld [vmem:[#allocation5 + $0x148] sm:$0xff]
    %v105 = vld [vmem:[#allocation5 + $0x150] sm:$0xff]
    %v106 = vld [vmem:[#allocation5 + $0x158] sm:$0xff]
    %v107 = vld [vmem:[#allocation5 + $0x160] sm:$0xff]
    %v108 = vld [vmem:[#allocation5 + $0x168] sm:$0xff]
    %v109 = vld [vmem:[#allocation5 + $0x170] sm:$0xff]
    %v110 = vld [vmem:[#allocation5 + $0x178] sm:$0xff]
    %v111 = vld [vmem:[#allocation5 + $0x180] sm:$0xff]
    %v112 = vld [vmem:[#allocation5 + $0x188] sm:$0xff]
    %v113 = vld [vmem:[#allocation5 + $0x190] sm:$0xff]
    %v114 = vld [vmem:[#allocation5 + $0x198] sm:$0xff]
    %v115 = vld [vmem:[#allocation5 + $0x1a0] sm:$0xff]
    %v116 = vld [vmem:[#allocation5 + $0x1a8] sm:$0xff]
    %v117 = vld [vmem:[#allocation5 + $0x1b0] sm:$0xff]
    %v118 = vld [vmem:[#allocation5 + $0x1b8] sm:$0xff]
    %v119 = vld [vmem:[#allocation5 + $0x1c0] sm:$0xff]
    %v120 = vld [vmem:[#allocation5 + $0x1c8] sm:$0xff]
    %v121 = vld [vmem:[#allocation5 + $0x1d0] sm:$0xff]
    %v122 = vld [vmem:[#allocation5 + $0x1d8] sm:$0xff]
    %v123 = vld [vmem:[#allocation5 + $0x1e0] sm:$0xff]
    %v124 = vld [vmem:[#allocation5 + $0x1e8] sm:$0xff]
    %v125 = vld [vmem:[#allocation5 + $0x1f0] sm:$0xff]
    %v126 = vld [vmem:[#allocation5 + $0x1f8] sm:$0xff]
    %v127 = vld [vmem:[#allocation5 + $0x200] sm:$0xff]
    %v128 = vld [vmem:[#allocation5 + $0x208] sm:$0xff]
    %v129 = vld [vmem:[#allocation5 + $0x210] sm:$0xff]
    %v130 = vld [vmem:[#allocation5 + $0x218] sm:$0xff]
    %v131 = vld [vmem:[#allocation5 + $0x220] sm:$0xff]
    %v132 = vld [vmem:[#allocation5 + $0x228] sm:$0xff]
    %v133 = vld [vmem:[#allocation5 + $0x230] sm:$0xff]
    %v134 = vld [vmem:[#allocation5 + $0x238] sm:$0xff]
    %v135 = vld [vmem:[#allocation5 + $0x240] sm:$0xff]
    %v136 = vld [vmem:[#allocation5 + $0x248] sm:$0xff]
    %v137 = vld [vmem:[#allocation5 + $0x250] sm:$0xff]
    %v138 = vld [vmem:[#allocation5 + $0x258] sm:$0xff]
    %v139 = vld [vmem:[#allocation5 + $0x260] sm:$0xff]
    %v140 = vld [vmem:[#allocation5 + $0x268] sm:$0xff]
    %v141 = vld [vmem:[#allocation5 + $0x270] sm:$0xff]
    %v142 = vld [vmem:[#allocation5 + $0x278] sm:$0xff]
    %v143 = vld [vmem:[#allocation5 + $0x280] sm:$0xff]
    %v144 = vld [vmem:[#allocation5 + $0x288] sm:$0xff]
    %v145 = vld [vmem:[#allocation5 + $0x290] sm:$0xff]
    %v146 = vld [vmem:[#allocation5 + $0x298] sm:$0xff]
    %v147 = vld [vmem:[#allocation5 + $0x2a0] sm:$0xff]
    %v148 = vld [vmem:[#allocation5 + $0x2a8] sm:$0xff]
    %v149 = vld [vmem:[#allocation5 + $0x2b0] sm:$0xff]
    %v150 = vld [vmem:[#allocation5 + $0x2b8] sm:$0xff]
    %v151 = vld [vmem:[#allocation5 + $0x2c0] sm:$0xff]
    %v152 = vld [vmem:[#allocation5 + $0x2c8] sm:$0xff]
    %v153 = vld [vmem:[#allocation5 + $0x2d0] sm:$0xff]
    %v154 = vld [vmem:[#allocation5 + $0x2d8] sm:$0xff]
    %v155 = vld [vmem:[#allocation5 + $0x2e0] sm:$0xff]
    %v156 = vld [vmem:[#allocation5 + $0x2e8] sm:$0xff]
    %v157 = vld [vmem:[#allocation5 + $0x2f0] sm:$0xff]
    %v158 = vld [vmem:[#allocation5 + $0x2f8] sm:$0xff]
    %v159 = vld [vmem:[#allocation5 + $0x300] sm:$0xff]
    %v160 = vld [vmem:[#allocation5 + $0x308] sm:$0xff]
    %v161 = vld [vmem:[#allocation5 + $0x310] sm:$0xff]
    %v162 = vld [vmem:[#allocation5 + $0x318] sm:$0xff]
    %v163 = vld [vmem:[#allocation5 + $0x320] sm:$0xff]
    %v164 = vld [vmem:[#allocation5 + $0x328] sm:$0xff]
    %v165 = vld [vmem:[#allocation5 + $0x330] sm:$0xff]
    %v166 = vld [vmem:[#allocation5 + $0x338] sm:$0xff]
    %v167 = vld [vmem:[#allocation5 + $0x340] sm:$0xff]
    %v168 = vld [vmem:[#allocation5 + $0x348] sm:$0xff]
    %v169 = vld [vmem:[#allocation5 + $0x350] sm:$0xff]
    %v170 = vld [vmem:[#allocation5 + $0x358] sm:$0xff]
    %v171 = vld [vmem:[#allocation5 + $0x360] sm:$0xff]
    %v172 = vld [vmem:[#allocation5 + $0x368] sm:$0xff]
    %v173 = vld [vmem:[#allocation5 + $0x370] sm:$0xff]
    %v174 = vld [vmem:[#allocation5 + $0x378] sm:$0xff]
    %v175 = vld [vmem:[#allocation5 + $0x380] sm:$0xff]
    %v176 = vld [vmem:[#allocation5 + $0x388] sm:$0xff]
    %v177 = vld [vmem:[#allocation5 + $0x390] sm:$0xff]
    %v178 = vld [vmem:[#allocation5 + $0x398] sm:$0xff]
    %v179 = vld [vmem:[#allocation5 + $0x3a0] sm:$0xff]
    %v180 = vld [vmem:[#allocation5 + $0x3a8] sm:$0xff]
    %v181 = vld [vmem:[#allocation5 + $0x3b0] sm:$0xff]
    %v182 = vld [vmem:[#allocation5 + $0x3b8] sm:$0xff]
    %v183 = vld [vmem:[#allocation5 + $0x3c0] sm:$0xff]
    %v184 = vld [vmem:[#allocation5 + $0x3c8] sm:$0xff]
    %v185 = vld [vmem:[#allocation5 + $0x3d0] sm:$0xff]
    %v186 = vld [vmem:[#allocation5 + $0x3d8] sm:$0xff]
    %v187 = vld [vmem:[#allocation5 + $0x3e0] sm:$0xff]
    %v188 = vld [vmem:[#allocation5 + $0x3e8] sm:$0xff]
    %v189 = vld [vmem:[#allocation5 + $0x3f0] sm:$0xff]
    %v190 = vld [vmem:[#allocation5 + $0x3f8] sm:$0xff]
    %v191 = vld [vmem:[%s3] sm:$0xf]
    %v193 = vlaneseq
    %v194 = vshrl.u32 %v193, 7
    %v195 = vsub.s32 0, %v194
    %v196 = vrot.slane %v191, %v195
    %v197 = vlaneseq
    %v198 = vshrl.u32 %v197, 7
    %v199 = vsub.s32 1, %v198
    %v200 = vrot.slane %v191, %v199
    %v201 = vlaneseq
    %v202 = vshrl.u32 %v201, 7
    %v203 = vsub.s32 2, %v202
    %v204 = vrot.slane %v191, %v203
    %v205 = vlaneseq
    %v206 = vshrl.u32 %v205, 7
    %v207 = vsub.s32 3, %v206
    %v208 = vrot.slane %v191, %v207
    %213 = vmatprep.subr.mxu0 %v64
    %214 = vmatpush1.msra.mxu0 %v63
    %215 = vmatprep.subr.mxu0 %v68
    %216 = vmatpush1.msra.mxu0 %v67
    %217 = vmatprep.subr.mxu0 %v72
    %218 = vmatpush1.msra.mxu0 %v71
    %219 = vmatprep.subr.mxu0 %v76
    %220 = vmatpush1.msra.mxu0 %v75
    %221 = vmatprep.subr.mxu0 %v80
    %222 = vmatpush1.msra.mxu0 %v79
    %223 = vmatprep.subr.mxu0 %v84
    %224 = vmatpush1.msra.mxu0 %v83
    %225 = vmatprep.subr.mxu0 %v88
    %226 = vmatpush1.msra.mxu0 %v87
    %227 = vmatprep.subr.mxu0 %v92
    %228 = vmatpush1.msra.mxu0 %v91
    %229 = vmatprep.subr.mxu0 %v96
    %230 = vmatpush1.msra.mxu0 %v95
    %231 = vmatprep.subr.mxu0 %v100
    %232 = vmatpush1.msra.mxu0 %v99
    %233 = vmatprep.subr.mxu0 %v104
    %234 = vmatpush1.msra.mxu0 %v103
    %235 = vmatprep.subr.mxu0 %v108
    %236 = vmatpush1.msra.mxu0 %v107
    %237 = vmatprep.subr.mxu0 %v112
    %238 = vmatpush1.msra.mxu0 %v111
    %239 = vmatprep.subr.mxu0 %v116
    %240 = vmatpush1.msra.mxu0 %v115
    %241 = vmatprep.subr.mxu0 %v120
    %242 = vmatpush1.msra.mxu0 %v119
    %243 = vmatprep.subr.mxu0 %v124
    %244 = vmatpush1.msra.mxu0 %v123
    %245 = vmatprep.subr.mxu0 %v128
    %246 = vmatpush1.msra.mxu0 %v127
    %247 = vmatprep.subr.mxu0 %v132
    %248 = vmatpush1.msra.mxu0 %v131
    %249 = vmatprep.subr.mxu0 %v136
    %250 = vmatpush1.msra.mxu0 %v135
    %251 = vmatprep.subr.mxu0 %v140
    %252 = vmatpush1.msra.mxu0 %v139
    %253 = vmatprep.subr.mxu0 %v144
    %254 = vmatpush1.msra.mxu0 %v143
    %255 = vmatprep.subr.mxu0 %v148
    %256 = vmatpush1.msra.mxu0 %v147
    %257 = vmatprep.subr.mxu0 %v152
    %258 = vmatpush1.msra.mxu0 %v151
    %259 = vmatprep.subr.mxu0 %v156
    %260 = vmatpush1.msra.mxu0 %v155
    %261 = vmatprep.subr.mxu0 %v160
    %262 = vmatpush1.msra.mxu0 %v159
    %263 = vmatprep.subr.mxu0 %v164
    %264 = vmatpush1.msra.mxu0 %v163
    %265 = vmatprep.subr.mxu0 %v168
    %266 = vmatpush1.msra.mxu0 %v167
    %267 = vmatprep.subr.mxu0 %v172
    %268 = vmatpush1.msra.mxu0 %v171
    %269 = vmatprep.subr.mxu0 %v176
    %270 = vmatpush1.msra.mxu0 %v175
    %271 = vmatprep.subr.mxu0 %v180
    %272 = vmatpush1.msra.mxu0 %v179
    %273 = vmatprep.subr.mxu0 %v184
    %274 = vmatpush1.msra.mxu0 %v183
    %275 = vmatprep.subr.mxu0 %v188
    %276 = vmatpush1.msra.mxu0 %v187
    %277 = vmatprep.mubr.f32.mxu0 %v60
    %278 = vmatmul.mubr.f32.gmra.mrb[0].mxu0 %v59
    %v279 = vpop.f32.mrb[0].mxu0
    %v280 = vadd.f32 %v196, %v279
    %v281 = vpop.f32.mrb[0].mxu0
    %v282 = vadd.f32 %v200, %v281
    %283 = vmatprep.mubr.f32.mxu0 %v62
    %284 = vmatmul.mubr.f32.gmra.mrb[0].mxu0 %v61
    %v285 = vpop.f32.mrb[0].mxu0
    %v286 = vadd.f32 %v196, %v285
    %v287 = vpop.f32.mrb[0].mxu0
    %v288 = vadd.f32 %v200, %v287
    %289 = vdwg.mxu0
    %290 = vmatprep.subr.mxu0 %v66
    %291 = vmatpush1.msra.mxu0 %v65
    %292 = vmatprep.subr.mxu0 %v70
    %293 = vmatpush1.msra.mxu0 %v69
    %294 = vmatprep.subr.mxu0 %v74
    %295 = vmatpush1.msra.mxu0 %v73
    %296 = vmatprep.subr.mxu0 %v78
    %297 = vmatpush1.msra.mxu0 %v77
    %298 = vmatprep.subr.mxu0 %v82
    %299 = vmatpush1.msra.mxu0 %v81
    %300 = vmatprep.subr.mxu0 %v86
    %301 = vmatpush1.msra.mxu0 %v85
    %302 = vmatprep.subr.mxu0 %v90
    %303 = vmatpush1.msra.mxu0 %v89
    %304 = vmatprep.subr.mxu0 %v94
    %305 = vmatpush1.msra.mxu0 %v93
    %306 = vmatprep.subr.mxu0 %v98
    %307 = vmatpush1.msra.mxu0 %v97
    %308 = vmatprep.subr.mxu0 %v102
    %309 = vmatpush1.msra.mxu0 %v101
    %310 = vmatprep.subr.mxu0 %v106
    %311 = vmatpush1.msra.mxu0 %v105
    %312 = vmatprep.subr.mxu0 %v110
    %313 = vmatpush1.msra.mxu0 %v109
    %314 = vmatprep.subr.mxu0 %v114
    %315 = vmatpush1.msra.mxu0 %v113
    %316 = vmatprep.subr.mxu0 %v118
    %317 = vmatpush1.msra.mxu0 %v117
    %318 = vmatprep.subr.mxu0 %v122
    %319 = vmatpush1.msra.mxu0 %v121
    %320 = vmatprep.subr.mxu0 %v126
    %321 = vmatpush1.msra.mxu0 %v125
    %322 = vmatprep.subr.mxu0 %v130
    %323 = vmatpush1.msra.mxu0 %v129
    %324 = vmatprep.subr.mxu0 %v134
    %325 = vmatpush1.msra.mxu0 %v133
    %326 = vmatprep.subr.mxu0 %v138
    %327 = vmatpush1.msra.mxu0 %v137
    %328 = vmatprep.subr.mxu0 %v142
    %329 = vmatpush1.msra.mxu0 %v141
    %330 = vmatprep.subr.mxu0 %v146
    %331 = vmatpush1.msra.mxu0 %v145
    %332 = vmatprep.subr.mxu0 %v150
    %333 = vmatpush1.msra.mxu0 %v149
    %334 = vmatprep.subr.mxu0 %v154
    %335 = vmatpush1.msra.mxu0 %v153
    %336 = vmatprep.subr.mxu0 %v158
    %337 = vmatpush1.msra.mxu0 %v157
    %338 = vmatprep.subr.mxu0 %v162
    %339 = vmatpush1.msra.mxu0 %v161
    %340 = vmatprep.subr.mxu0 %v166
    %341 = vmatpush1.msra.mxu0 %v165
    %342 = vmatprep.subr.mxu0 %v170
    %343 = vmatpush1.msra.mxu0 %v169
    %344 = vmatprep.subr.mxu0 %v174
    %345 = vmatpush1.msra.mxu0 %v173
    %346 = vmatprep.subr.mxu0 %v178
    %347 = vmatpush1.msra.mxu0 %v177
    %348 = vmatprep.subr.mxu0 %v182
    %349 = vmatpush1.msra.mxu0 %v181
    %350 = vmatprep.subr.mxu0 %v186
    %351 = vmatpush1.msra.mxu0 %v185
    %352 = vmatprep.subr.mxu0 %v190
    %353 = vmatpush1.msra.mxu0 %v189
    %354 = vmatprep.mubr.f32.mxu0 %v60
    %355 = vmatmul.mubr.f32.gmra.mrb[0].mxu0 %v59
    %v356 = vpop.f32.mrb[0].mxu0
    %v357 = vadd.f32 %v204, %v356
    %v358 = vpop.f32.mrb[0].mxu0
    %v359 = vadd.f32 %v208, %v358
    %360 = vmatprep.mubr.f32.mxu0 %v62
    %361 = vmatmul.mubr.f32.gmra.mrb[0].mxu0 %v61
    %v362 = vpop.f32.mrb[0].mxu0
    %v363 = vadd.f32 %v204, %v362
    %v364 = vpop.f32.mrb[0].mxu0
    %v365 = vadd.f32 %v208, %v364
    %366 = vdwg.mxu0
    %v367 = vld [vmem:[#allocation7] sm:$0xff]
    %v368 = vld [vmem:[#allocation7 + $0x8] sm:$0xff]
    %v369 = vld [vmem:[#allocation7 + $0x10] sm:$0xff]
    %v370 = vld [vmem:[#allocation7 + $0x18] sm:$0xff]
    %v371 = vld [vmem:[#allocation7 + $0x20] sm:$0xff]
    %v372 = vld [vmem:[#allocation7 + $0x28] sm:$0xff]
    %v373 = vld [vmem:[#allocation7 + $0x30] sm:$0xff]
    %v374 = vld [vmem:[#allocation7 + $0x38] sm:$0xff]
    %v375 = vld [vmem:[#allocation7 + $0x40] sm:$0xff]
    %v376 = vld [vmem:[#allocation7 + $0x48] sm:$0xff]
    %v377 = vld [vmem:[#allocation7 + $0x50] sm:$0xff]
    %v378 = vld [vmem:[#allocation7 + $0x58] sm:$0xff]
    %v379 = vld [vmem:[#allocation7 + $0x60] sm:$0xff]
    %v380 = vld [vmem:[#allocation7 + $0x68] sm:$0xff]
    %v381 = vld [vmem:[#allocation7 + $0x70] sm:$0xff]
    %v382 = vld [vmem:[#allocation7 + $0x78] sm:$0xff]
    %v383 = vld [vmem:[#allocation7 + $0x80] sm:$0xff]
    %v384 = vld [vmem:[#allocation7 + $0x88] sm:$0xff]
    %v385 = vld [vmem:[#allocation7 + $0x90] sm:$0xff]
    %v386 = vld [vmem:[#allocation7 + $0x98] sm:$0xff]
    %v387 = vld [vmem:[#allocation7 + $0xa0] sm:$0xff]
    %v388 = vld [vmem:[#allocation7 + $0xa8] sm:$0xff]
    %v389 = vld [vmem:[#allocation7 + $0xb0] sm:$0xff]
    %v390 = vld [vmem:[#allocation7 + $0xb8] sm:$0xff]
    %v391 = vld [vmem:[#allocation7 + $0xc0] sm:$0xff]
    %v392 = vld [vmem:[#allocation7 + $0xc8] sm:$0xff]
    %v393 = vld [vmem:[#allocation7 + $0xd0] sm:$0xff]
    %v394 = vld [vmem:[#allocation7 + $0xd8] sm:$0xff]
    %v395 = vld [vmem:[#allocation7 + $0xe0] sm:$0xff]
    %v396 = vld [vmem:[#allocation7 + $0xe8] sm:$0xff]
    %v397 = vld [vmem:[#allocation7 + $0xf0] sm:$0xff]
    %v398 = vld [vmem:[#allocation7 + $0xf8] sm:$0xff]
    %v399 = vld [vmem:[#allocation7 + $0x100] sm:$0xff]
    %v400 = vld [vmem:[#allocation7 + $0x108] sm:$0xff]
    %v401 = vld [vmem:[#allocation7 + $0x110] sm:$0xff]
    %v402 = vld [vmem:[#allocation7 + $0x118] sm:$0xff]
    %v403 = vld [vmem:[#allocation7 + $0x120] sm:$0xff]
    %v404 = vld [vmem:[#allocation7 + $0x128] sm:$0xff]
    %v405 = vld [vmem:[#allocation7 + $0x130] sm:$0xff]
    %v406 = vld [vmem:[#allocation7 + $0x138] sm:$0xff]
    %v407 = vld [vmem:[#allocation7 + $0x140] sm:$0xff]
    %v408 = vld [vmem:[#allocation7 + $0x148] sm:$0xff]
    %v409 = vld [vmem:[#allocation7 + $0x150] sm:$0xff]
    %v410 = vld [vmem:[#allocation7 + $0x158] sm:$0xff]
    %v411 = vld [vmem:[#allocation7 + $0x160] sm:$0xff]
    %v412 = vld [vmem:[#allocation7 + $0x168] sm:$0xff]
    %v413 = vld [vmem:[#allocation7 + $0x170] sm:$0xff]
    %v414 = vld [vmem:[#allocation7 + $0x178] sm:$0xff]
    %v415 = vld [vmem:[#allocation7 + $0x180] sm:$0xff]
    %v416 = vld [vmem:[#allocation7 + $0x188] sm:$0xff]
    %v417 = vld [vmem:[#allocation7 + $0x190] sm:$0xff]
    %v418 = vld [vmem:[#allocation7 + $0x198] sm:$0xff]
    %v419 = vld [vmem:[#allocation7 + $0x1a0] sm:$0xff]
    %v420 = vld [vmem:[#allocation7 + $0x1a8] sm:$0xff]
    %v421 = vld [vmem:[#allocation7 + $0x1b0] sm:$0xff]
    %v422 = vld [vmem:[#allocation7 + $0x1b8] sm:$0xff]
    %v423 = vld [vmem:[#allocation7 + $0x1c0] sm:$0xff]
    %v424 = vld [vmem:[#allocation7 + $0x1c8] sm:$0xff]
    %v425 = vld [vmem:[#allocation7 + $0x1d0] sm:$0xff]
    %v426 = vld [vmem:[#allocation7 + $0x1d8] sm:$0xff]
    %v427 = vld [vmem:[#allocation7 + $0x1e0] sm:$0xff]
    %v428 = vld [vmem:[#allocation7 + $0x1e8] sm:$0xff]
    %v429 = vld [vmem:[#allocation7 + $0x1f0] sm:$0xff]
    %v430 = vld [vmem:[#allocation7 + $0x1f8] sm:$0xff]
    %431 = vmatprep.subr.mxu0 %v368
    %432 = vmatpush1.msra.mxu0 %v367
    %433 = vmatprep.subr.mxu0 %v372
    %434 = vmatpush1.msra.mxu0 %v371
    %435 = vmatprep.subr.mxu0 %v376
    %436 = vmatpush1.msra.mxu0 %v375
    %437 = vmatprep.subr.mxu0 %v380
    %438 = vmatpush1.msra.mxu0 %v379
    %439 = vmatprep.subr.mxu0 %v384
    %440 = vmatpush1.msra.mxu0 %v383
    %441 = vmatprep.subr.mxu0 %v388
    %442 = vmatpush1.msra.mxu0 %v387
    %443 = vmatprep.subr.mxu0 %v392
    %444 = vmatpush1.msra.mxu0 %v391
    %445 = vmatprep.subr.mxu0 %v396
    %446 = vmatpush1.msra.mxu0 %v395
    %447 = vmatprep.subr.mxu0 %v400
    %448 = vmatpush1.msra.mxu0 %v399
    %449 = vmatprep.subr.mxu0 %v404
    %450 = vmatpush1.msra.mxu0 %v403
    %451 = vmatprep.subr.mxu0 %v408
    %452 = vmatpush1.msra.mxu0 %v407
    %453 = vmatprep.subr.mxu0 %v412
    %454 = vmatpush1.msra.mxu0 %v411
    %455 = vmatprep.subr.mxu0 %v416
    %456 = vmatpush1.msra.mxu0 %v415
    %457 = vmatprep.subr.mxu0 %v420
    %458 = vmatpush1.msra.mxu0 %v419
    %459 = vmatprep.subr.mxu0 %v424
    %460 = vmatpush1.msra.mxu0 %v423
    %461 = vmatprep.subr.mxu0 %v428
    %462 = vmatpush1.msra.mxu0 %v427
    %463 = vmatprep.subr.mxu0 0.0
    %464 = vmatpush1.msra.mxu0 0.0
    %465 = vmatprep.subr.mxu0 0.0
    %466 = vmatpush1.msra.mxu0 0.0
    %467 = vmatprep.subr.mxu0 0.0
    %468 = vmatpush1.msra.mxu0 0.0
    %469 = vmatprep.subr.mxu0 0.0
    %470 = vmatpush1.msra.mxu0 0.0
    %471 = vmatprep.subr.mxu0 0.0
    %472 = vmatpush1.msra.mxu0 0.0
    %473 = vmatprep.subr.mxu0 0.0
    %474 = vmatpush1.msra.mxu0 0.0
    %475 = vmatprep.subr.mxu0 0.0
    %476 = vmatpush1.msra.mxu0 0.0
    %477 = vmatprep.subr.mxu0 0.0
    %478 = vmatpush1.msra.mxu0 0.0
    %479 = vmatprep.subr.mxu0 0.0
    %480 = vmatpush1.msra.mxu0 0.0
    %481 = vmatprep.subr.mxu0 0.0
    %482 = vmatpush1.msra.mxu0 0.0
    %483 = vmatprep.subr.mxu0 0.0
    %484 = vmatpush1.msra.mxu0 0.0
    %485 = vmatprep.subr.mxu0 0.0
    %486 = vmatpush1.msra.mxu0 0.0
    %487 = vmatprep.subr.mxu0 0.0
    %488 = vmatpush1.msra.mxu0 0.0
    %489 = vmatprep.subr.mxu0 0.0
    %490 = vmatpush1.msra.mxu0 0.0
    %491 = vmatprep.subr.mxu0 0.0
    %492 = vmatpush1.msra.mxu0 0.0
    %493 = vmatprep.subr.mxu0 0.0
    %494 = vmatpush1.msra.mxu0 0.0
    %495 = vmatprep.mubr.f32.mxu0 0.0
    %496 = vmatmul.mubr.f32.gmra.mrb[0].mxu0 0.0
    %v497 = vpop.f32.mrb[0].mxu0
    %v498 = vadd.f32 0.0, %v497
    %v499 = vpop.f32.mrb[0].mxu0
    %v500 = vadd.f32 0.0, %v499
    %501 = vdwg.mxu0
    %502 = vmatprep.subr.mxu0 %v370
    %503 = vmatpush1.msra.mxu0 %v369
    %504 = vmatprep.subr.mxu0 %v374
    %505 = vmatpush1.msra.mxu0 %v373
    %506 = vmatprep.subr.mxu0 %v378
    %507 = vmatpush1.msra.mxu0 %v377
    %508 = vmatprep.subr.mxu0 %v382
    %509 = vmatpush1.msra.mxu0 %v381
    %510 = vmatprep.subr.mxu0 %v386
    %511 = vmatpush1.msra.mxu0 %v385
    %512 = vmatprep.subr.mxu0 %v390
    %513 = vmatpush1.msra.mxu0 %v389
    %514 = vmatprep.subr.mxu0 %v394
    %515 = vmatpush1.msra.mxu0 %v393
    %516 = vmatprep.subr.mxu0 %v398
    %517 = vmatpush1.msra.mxu0 %v397
    %518 = vmatprep.subr.mxu0 %v402
    %519 = vmatpush1.msra.mxu0 %v401
    %520 = vmatprep.subr.mxu0 %v406
    %521 = vmatpush1.msra.mxu0 %v405
    %522 = vmatprep.subr.mxu0 %v410
    %523 = vmatpush1.msra.mxu0 %v409
    %524 = vmatprep.subr.mxu0 %v414
    %525 = vmatpush1.msra.mxu0 %v413
    %526 = vmatprep.subr.mxu0 %v418
    %527 = vmatpush1.msra.mxu0 %v417
    %528 = vmatprep.subr.mxu0 %v422
    %529 = vmatpush1.msra.mxu0 %v421
    %530 = vmatprep.subr.mxu0 %v426
    %531 = vmatpush1.msra.mxu0 %v425
    %532 = vmatprep.subr.mxu0 %v430
    %533 = vmatpush1.msra.mxu0 %v429
    %534 = vmatprep.subr.mxu0 0.0
    %535 = vmatpush1.msra.mxu0 0.0
    %536 = vmatprep.subr.mxu0 0.0
    %537 = vmatpush1.msra.mxu0 0.0
    %538 = vmatprep.subr.mxu0 0.0
    %539 = vmatpush1.msra.mxu0 0.0
    %540 = vmatprep.subr.mxu0 0.0
    %541 = vmatpush1.msra.mxu0 0.0
    %542 = vmatprep.subr.mxu0 0.0
    %543 = vmatpush1.msra.mxu0 0.0
    %544 = vmatprep.subr.mxu0 0.0
    %545 = vmatpush1.msra.mxu0 0.0
    %546 = vmatprep.subr.mxu0 0.0
    %547 = vmatpush1.msra.mxu0 0.0
    %548 = vmatprep.subr.mxu0 0.0
    %549 = vmatpush1.msra.mxu0 0.0
    %550 = vmatprep.subr.mxu0 0.0
    %551 = vmatpush1.msra.mxu0 0.0
    %552 = vmatprep.subr.mxu0 0.0
    %553 = vmatpush1.msra.mxu0 0.0
    %554 = vmatprep.subr.mxu0 0.0
    %555 = vmatpush1.msra.mxu0 0.0
    %556 = vmatprep.subr.mxu0 0.0
    %557 = vmatpush1.msra.mxu0 0.0
    %558 = vmatprep.subr.mxu0 0.0
    %559 = vmatpush1.msra.mxu0 0.0
    %560 = vmatprep.subr.mxu0 0.0
    %561 = vmatpush1.msra.mxu0 0.0
    %562 = vmatprep.subr.mxu0 0.0
    %563 = vmatpush1.msra.mxu0 0.0
    %564 = vmatprep.subr.mxu0 0.0
    %565 = vmatpush1.msra.mxu0 0.0
    %566 = vmatprep.mubr.f32.mxu0 0.0
    %567 = vmatmul.mubr.f32.gmra.mrb[0].mxu0 0.0
    %v568 = vpop.f32.mrb[0].mxu0
    %v569 = vadd.f32 0.0, %v568
    %v570 = vpop.f32.mrb[0].mxu0
    %v571 = vadd.f32 0.0, %v570
    %572 = vdwg.mxu0
    %v573 = vadd.f32 %v280, %v498
    %v574 = vadd.f32 %v282, %v500
    %v575 = vadd.f32 %v357, %v569
    %v576 = vadd.f32 %v359, %v571
    %v577 = vxor.u32 %v573, 2147483648
    %v578 = vxor.u32 %v574, 2147483648
    %v579 = vxor.u32 %v575, 2147483648
    %v580 = vmul.f32 %v577, 1.442695
    %v581 = vpow.pop %v580
    %v582 = vmul.f32 %v578, 1.442695
    %v583 = vpow.pop %v582
    %v584 = vmul.f32 %v579, 1.442695
    %v585 = vpow.pop %v584
    %v586 = vadd.f32 %v581, 1.0
    %v587 = vadd.f32 %v583, 1.0
    %v588 = vadd.f32 %v585, 1.0
    %v589 = vrcp.pop %v586
    %v590 = vmul.f32 1.0, %v589
    %v591 = vrcp.pop %v587
    %v592 = vmul.f32 1.0, %v591
    %v593 = vrcp.pop %v588
    %v594 = vmul.f32 1.0, %v593
    %v595 = vtanh.pop %v576
    %v596 = vmul.f32 %v592, 0.0
    %v597 = vmul.f32 %v590, %v595
    %v598 = vadd.f32 %v596, %v597
    %v599 = vtanh.pop %v598
    %v600 = vmul.f32 %v594, %v599
    %v603 = vunpack.c.l.s4 1966171168
    %v604 = vunpack.c.0.s8 %v603
    %v605 = vlaneseq
    %v606 = vshrl.u32 %v605, 7
    %v607 = vsub.s32 %v604, %v606
    %v608 = vrot.slane %v600, %v607
    %v609 = vcombine.high %v608, %v608
    %v611 = vunpack.c.l.s4 1966171168
    %v612 = vunpack.c.0.s8 %v611
    %v613 = vlaneseq
    %v614 = vshrl.u32 %v613, 7
    %v615 = vsub.s32 %v612, %v614
    %v616 = vrot.slane %v608, %v615
    %v618 = vunpack.c.l.s4 1966171168
    %v619 = vunpack.c.0.s8 %v618
    %v620 = vlaneseq
    %v621 = vshrl.u32 %v620, 7
    %v622 = vsub.s32 %v619, %v621
    %v623 = vrot.slane %v609, %v622
    %626 = vst [vmem:[#allocation8] sm:$0x1] %v616
    %627 = vst [vmem:[#allocation8 + $0x8] sm:$0x1] %v623
    %628 = vmatprep.subr.mxu0 %v368
    %629 = vmatpush1.msra.mxu0 %v367
    %630 = vmatprep.subr.mxu0 %v372
    %631 = vmatpush1.msra.mxu0 %v371
    %632 = vmatprep.subr.mxu0 %v376
    %633 = vmatpush1.msra.mxu0 %v375
    %634 = vmatprep.subr.mxu0 %v380
    %635 = vmatpush1.msra.mxu0 %v379
    %636 = vmatprep.subr.mxu0 %v384
    %637 = vmatpush1.msra.mxu0 %v383
    %638 = vmatprep.subr.mxu0 %v388
    %639 = vmatpush1.msra.mxu0 %v387
    %640 = vmatprep.subr.mxu0 %v392
    %641 = vmatpush1.msra.mxu0 %v391
    %642 = vmatprep.subr.mxu0 %v396
    %643 = vmatpush1.msra.mxu0 %v395
    %644 = vmatprep.subr.mxu0 %v400
    %645 = vmatpush1.msra.mxu0 %v399
    %646 = vmatprep.subr.mxu0 %v404
    %647 = vmatpush1.msra.mxu0 %v403
    %648 = vmatprep.subr.mxu0 %v408
    %649 = vmatpush1.msra.mxu0 %v407
    %650 = vmatprep.subr.mxu0 %v412
    %651 = vmatpush1.msra.mxu0 %v411
    %652 = vmatprep.subr.mxu0 %v416
    %653 = vmatpush1.msra.mxu0 %v415
    %654 = vmatprep.subr.mxu0 %v420
    %655 = vmatpush1.msra.mxu0 %v419
    %656 = vmatprep.subr.mxu0 %v424
    %657 = vmatpush1.msra.mxu0 %v423
    %658 = vmatprep.subr.mxu0 %v428
    %659 = vmatpush1.msra.mxu0 %v427
    %660 = vmatprep.subr.mxu0 0.0
    %661 = vmatpush1.msra.mxu0 0.0
    %662 = vmatprep.subr.mxu0 0.0
    %663 = vmatpush1.msra.mxu0 0.0
    %664 = vmatprep.subr.mxu0 0.0
    %665 = vmatpush1.msra.mxu0 0.0
    %666 = vmatprep.subr.mxu0 0.0
    %667 = vmatpush1.msra.mxu0 0.0
    %668 = vmatprep.subr.mxu0 0.0
    %669 = vmatpush1.msra.mxu0 0.0
    %670 = vmatprep.subr.mxu0 0.0
    %671 = vmatpush1.msra.mxu0 0.0
    %672 = vmatprep.subr.mxu0 0.0
    %673 = vmatpush1.msra.mxu0 0.0
    %674 = vmatprep.subr.mxu0 0.0
    %675 = vmatpush1.msra.mxu0 0.0
    %676 = vmatprep.subr.mxu0 0.0
    %677 = vmatpush1.msra.mxu0 0.0
    %678 = vmatprep.subr.mxu0 0.0
    %679 = vmatpush1.msra.mxu0 0.0
    %680 = vmatprep.subr.mxu0 0.0
    %681 = vmatpush1.msra.mxu0 0.0
    %682 = vmatprep.subr.mxu0 0.0
    %683 = vmatpush1.msra.mxu0 0.0
    %684 = vmatprep.subr.mxu0 0.0
    %685 = vmatpush1.msra.mxu0 0.0
    %686 = vmatprep.subr.mxu0 0.0
    %687 = vmatpush1.msra.mxu0 0.0
    %688 = vmatprep.subr.mxu0 0.0
    %689 = vmatpush1.msra.mxu0 0.0
    %690 = vmatprep.subr.mxu0 0.0
    %691 = vmatpush1.msra.mxu0 0.0
    %692 = vmatprep.mubr.f32.mxu0 0.0
    %693 = vmatmul.mubr.f32.gmra.mrb[0].mxu0 %v600
    %v694 = vpop.f32.mrb[0].mxu0
    %v695 = vadd.f32 0.0, %v694
    %v696 = vpop.f32.mrb[0].mxu0
    %v697 = vadd.f32 0.0, %v696
    %698 = vdwg.mxu0
    %699 = vmatprep.subr.mxu0 %v370
    %700 = vmatpush1.msra.mxu0 %v369
    %701 = vmatprep.subr.mxu0 %v374
    %702 = vmatpush1.msra.mxu0 %v373
    %703 = vmatprep.subr.mxu0 %v378
    %704 = vmatpush1.msra.mxu0 %v377
    %705 = vmatprep.subr.mxu0 %v382
    %706 = vmatpush1.msra.mxu0 %v381
    %707 = vmatprep.subr.mxu0 %v386
    %708 = vmatpush1.msra.mxu0 %v385
    %709 = vmatprep.subr.mxu0 %v390
    %710 = vmatpush1.msra.mxu0 %v389
    %711 = vmatprep.subr.mxu0 %v394
    %712 = vmatpush1.msra.mxu0 %v393
    %713 = vmatprep.subr.mxu0 %v398
    %714 = vmatpush1.msra.mxu0 %v397
    %715 = vmatprep.subr.mxu0 %v402
    %716 = vmatpush1.msra.mxu0 %v401
    %717 = vmatprep.subr.mxu0 %v406
    %718 = vmatpush1.msra.mxu0 %v405
    %719 = vmatprep.subr.mxu0 %v410
    %720 = vmatpush1.msra.mxu0 %v409
    %721 = vmatprep.subr.mxu0 %v414
    %722 = vmatpush1.msra.mxu0 %v413
    %723 = vmatprep.subr.mxu0 %v418
    %724 = vmatpush1.msra.mxu0 %v417
    %725 = vmatprep.subr.mxu0 %v422
    %726 = vmatpush1.msra.mxu0 %v421
    %727 = vmatprep.subr.mxu0 %v426
    %728 = vmatpush1.msra.mxu0 %v425
    %729 = vmatprep.subr.mxu0 %v430
    %730 = vmatpush1.msra.mxu0 %v429
    %731 = vmatprep.subr.mxu0 0.0
    %732 = vmatpush1.msra.mxu0 0.0
    %733 = vmatprep.subr.mxu0 0.0
    %734 = vmatpush1.msra.mxu0 0.0
    %735 = vmatprep.subr.mxu0 0.0
    %736 = vmatpush1.msra.mxu0 0.0
    %737 = vmatprep.subr.mxu0 0.0
    %738 = vmatpush1.msra.mxu0 0.0
    %739 = vmatprep.subr.mxu0 0.0
    %740 = vmatpush1.msra.mxu0 0.0
    %741 = vmatprep.subr.mxu0 0.0
    %742 = vmatpush1.msra.mxu0 0.0
    %743 = vmatprep.subr.mxu0 0.0
    %744 = vmatpush1.msra.mxu0 0.0
    %745 = vmatprep.subr.mxu0 0.0
    %746 = vmatpush1.msra.mxu0 0.0
    %747 = vmatprep.subr.mxu0 0.0
    %748 = vmatpush1.msra.mxu0 0.0
    %749 = vmatprep.subr.mxu0 0.0
    %750 = vmatpush1.msra.mxu0 0.0
    %751 = vmatprep.subr.mxu0 0.0
    %752 = vmatpush1.msra.mxu0 0.0
    %753 = vmatprep.subr.mxu0 0.0
    %754 = vmatpush1.msra.mxu0 0.0
    %755 = vmatprep.subr.mxu0 0.0
    %756 = vmatpush1.msra.mxu0 0.0
    %757 = vmatprep.subr.mxu0 0.0
    %758 = vmatpush1.msra.mxu0 0.0
    %759 = vmatprep.subr.mxu0 0.0
    %760 = vmatpush1.msra.mxu0 0.0
    %761 = vmatprep.subr.mxu0 0.0
    %762 = vmatpush1.msra.mxu0 0.0
    %763 = vmatprep.mubr.f32.mxu0 0.0
    %764 = vmatmul.mubr.f32.gmra.mrb[0].mxu0 %v600
    %v765 = vpop.f32.mrb[0].mxu0
    %v766 = vadd.f32 0.0, %v765
    %v767 = vpop.f32.mrb[0].mxu0
    %v768 = vadd.f32 0.0, %v767
    %769 = vdwg.mxu0
    %v774 = vrot.slane %v695, 6
    %v775 = vrot.slane %v697, 6
    %v776 = vrot.slane %v766, 6
    %v777 = vrot.slane %v768, 6
    %v782 = vadd.f32 %v280, %v774
    %v783 = vadd.f32 %v282, %v775
    %v784 = vadd.f32 %v357, %v776
    %v785 = vadd.f32 %v359, %v777
    %v786 = vxor.u32 %v782, 2147483648
    %v787 = vxor.u32 %v783, 2147483648
    %v788 = vxor.u32 %v784, 2147483648
    %v789 = vmul.f32 %v786, 1.442695
    %v790 = vpow.pop %v789
    %v791 = vmul.f32 %v787, 1.442695
    %v792 = vpow.pop %v791
    %v793 = vmul.f32 %v788, 1.442695
    %v794 = vpow.pop %v793
    %v795 = vadd.f32 %v790, 1.0
    %v796 = vadd.f32 %v792, 1.0
    %v797 = vadd.f32 %v794, 1.0
    %v798 = vrcp.pop %v795
    %v799 = vmul.f32 1.0, %v798
    %v800 = vrcp.pop %v796
    %v801 = vmul.f32 1.0, %v800
    %v802 = vrcp.pop %v797
    %v803 = vmul.f32 1.0, %v802
    %v804 = vtanh.pop %v785
    %v806 = vrot.slane %v598, 6
    %v808 = vmul.f32 %v801, %v806
    %v809 = vmul.f32 %v799, %v804
    %v810 = vadd.f32 %v808, %v809
    %v811 = vtanh.pop %v810
    %v812 = vmul.f32 %v803, %v811
    %v815 = vunpack.c.l.s4 1966171168
    %v816 = vunpack.c.0.s8 %v815
    %v817 = vlaneseq
    %v818 = vshrl.u32 %v817, 7
    %v819 = vsub.s32 %v816, %v818
    %v820 = vrot.slane %v812, %v819
    %v821 = vcombine.high %v820, %v820
    %v823 = vunpack.c.l.s4 1966171168
    %v824 = vunpack.c.0.s8 %v823
    %v825 = vlaneseq
    %v826 = vshrl.u32 %v825, 7
    %v827 = vsub.s32 %v824, %v826
    %v828 = vrot.slane %v820, %v827
    %v830 = vunpack.c.l.s4 1966171168
    %v831 = vunpack.c.0.s8 %v830
    %v832 = vlaneseq
    %v833 = vshrl.u32 %v832, 7
    %v834 = vsub.s32 %v831, %v833
    %v835 = vrot.slane %v821, %v834
    %v836 = vcombine.high %v828, %v828
    %v837 = vcombine.high %v835, %v835
    %840 = vst [vmem:[#allocation8 + $0x1] sm:$0x1] %v836
    %841 = vst [vmem:[#allocation8 + $0x9] sm:$0x1] %v837
    %v842 = vrot.slane %v812, 2
    %844 = vmatprep.subr.mxu0 %v368
    %845 = vmatpush1.msra.mxu0 %v367
    %846 = vmatprep.subr.mxu0 %v372
    %847 = vmatpush1.msra.mxu0 %v371
    %848 = vmatprep.subr.mxu0 %v376
    %849 = vmatpush1.msra.mxu0 %v375
    %850 = vmatprep.subr.mxu0 %v380
    %851 = vmatpush1.msra.mxu0 %v379
    %852 = vmatprep.subr.mxu0 %v384
    %853 = vmatpush1.msra.mxu0 %v383
    %854 = vmatprep.subr.mxu0 %v388
    %855 = vmatpush1.msra.mxu0 %v387
    %856 = vmatprep.subr.mxu0 %v392
    %857 = vmatpush1.msra.mxu0 %v391
    %858 = vmatprep.subr.mxu0 %v396
    %859 = vmatpush1.msra.mxu0 %v395
    %860 = vmatprep.subr.mxu0 %v400
    %861 = vmatpush1.msra.mxu0 %v399
    %862 = vmatprep.subr.mxu0 %v404
    %863 = vmatpush1.msra.mxu0 %v403
    %864 = vmatprep.subr.mxu0 %v408
    %865 = vmatpush1.msra.mxu0 %v407
    %866 = vmatprep.subr.mxu0 %v412
    %867 = vmatpush1.msra.mxu0 %v411
    %868 = vmatprep.subr.mxu0 %v416
    %869 = vmatpush1.msra.mxu0 %v415
    %870 = vmatprep.subr.mxu0 %v420
    %871 = vmatpush1.msra.mxu0 %v419
    %872 = vmatprep.subr.mxu0 %v424
    %873 = vmatpush1.msra.mxu0 %v423
    %874 = vmatprep.subr.mxu0 %v428
    %875 = vmatpush1.msra.mxu0 %v427
    %876 = vmatprep.subr.mxu0 0.0
    %877 = vmatpush1.msra.mxu0 0.0
    %878 = vmatprep.subr.mxu0 0.0
    %879 = vmatpush1.msra.mxu0 0.0
    %880 = vmatprep.subr.mxu0 0.0
    %881 = vmatpush1.msra.mxu0 0.0
    %882 = vmatprep.subr.mxu0 0.0
    %883 = vmatpush1.msra.mxu0 0.0
    %884 = vmatprep.subr.mxu0 0.0
    %885 = vmatpush1.msra.mxu0 0.0
    %886 = vmatprep.subr.mxu0 0.0
    %887 = vmatpush1.msra.mxu0 0.0
    %888 = vmatprep.subr.mxu0 0.0
    %889 = vmatpush1.msra.mxu0 0.0
    %890 = vmatprep.subr.mxu0 0.0
    %891 = vmatpush1.msra.mxu0 0.0
    %892 = vmatprep.subr.mxu0 0.0
    %893 = vmatpush1.msra.mxu0 0.0
    %894 = vmatprep.subr.mxu0 0.0
    %895 = vmatpush1.msra.mxu0 0.0
    %896 = vmatprep.subr.mxu0 0.0
    %897 = vmatpush1.msra.mxu0 0.0
    %898 = vmatprep.subr.mxu0 0.0
    %899 = vmatpush1.msra.mxu0 0.0
    %900 = vmatprep.subr.mxu0 0.0
    %901 = vmatpush1.msra.mxu0 0.0
    %902 = vmatprep.subr.mxu0 0.0
    %903 = vmatpush1.msra.mxu0 0.0
    %904 = vmatprep.subr.mxu0 0.0
    %905 = vmatpush1.msra.mxu0 0.0
    %906 = vmatprep.subr.mxu0 0.0
    %907 = vmatpush1.msra.mxu0 0.0
    %908 = vmatprep.mubr.f32.mxu0 0.0
    %909 = vmatmul.mubr.f32.gmra.mrb[0].mxu0 %v842
    %v910 = vpop.f32.mrb[0].mxu0
    %v911 = vadd.f32 0.0, %v910
    %v912 = vpop.f32.mrb[0].mxu0
    %v913 = vadd.f32 0.0, %v912
    %914 = vdwg.mxu0
    %915 = vmatprep.subr.mxu0 %v370
    %916 = vmatpush1.msra.mxu0 %v369
    %917 = vmatprep.subr.mxu0 %v374
    %918 = vmatpush1.msra.mxu0 %v373
    %919 = vmatprep.subr.mxu0 %v378
    %920 = vmatpush1.msra.mxu0 %v377
    %921 = vmatprep.subr.mxu0 %v382
    %922 = vmatpush1.msra.mxu0 %v381
    %923 = vmatprep.subr.mxu0 %v386
    %924 = vmatpush1.msra.mxu0 %v385
    %925 = vmatprep.subr.mxu0 %v390
    %926 = vmatpush1.msra.mxu0 %v389
    %927 = vmatprep.subr.mxu0 %v394
    %928 = vmatpush1.msra.mxu0 %v393
    %929 = vmatprep.subr.mxu0 %v398
    %930 = vmatpush1.msra.mxu0 %v397
    %931 = vmatprep.subr.mxu0 %v402
    %932 = vmatpush1.msra.mxu0 %v401
    %933 = vmatprep.subr.mxu0 %v406
    %934 = vmatpush1.msra.mxu0 %v405
    %935 = vmatprep.subr.mxu0 %v410
    %936 = vmatpush1.msra.mxu0 %v409
    %937 = vmatprep.subr.mxu0 %v414
    %938 = vmatpush1.msra.mxu0 %v413
    %939 = vmatprep.subr.mxu0 %v418
    %940 = vmatpush1.msra.mxu0 %v417
    %941 = vmatprep.subr.mxu0 %v422
    %942 = vmatpush1.msra.mxu0 %v421
    %943 = vmatprep.subr.mxu0 %v426
    %944 = vmatpush1.msra.mxu0 %v425
    %945 = vmatprep.subr.mxu0 %v430
    %946 = vmatpush1.msra.mxu0 %v429
    %947 = vmatprep.subr.mxu0 0.0
    %948 = vmatpush1.msra.mxu0 0.0
    %949 = vmatprep.subr.mxu0 0.0
    %950 = vmatpush1.msra.mxu0 0.0
    %951 = vmatprep.subr.mxu0 0.0
    %952 = vmatpush1.msra.mxu0 0.0
    %953 = vmatprep.subr.mxu0 0.0
    %954 = vmatpush1.msra.mxu0 0.0
    %955 = vmatprep.subr.mxu0 0.0
    %956 = vmatpush1.msra.mxu0 0.0
    %957 = vmatprep.subr.mxu0 0.0
    %958 = vmatpush1.msra.mxu0 0.0
    %959 = vmatprep.subr.mxu0 0.0
    %960 = vmatpush1.msra.mxu0 0.0
    %961 = vmatprep.subr.mxu0 0.0
    %962 = vmatpush1.msra.mxu0 0.0
    %963 = vmatprep.subr.mxu0 0.0
    %964 = vmatpush1.msra.mxu0 0.0
    %965 = vmatprep.subr.mxu0 0.0
    %966 = vmatpush1.msra.mxu0 0.0
    %967 = vmatprep.subr.mxu0 0.0
    %968 = vmatpush1.msra.mxu0 0.0
    %969 = vmatprep.subr.mxu0 0.0
    %970 = vmatpush1.msra.mxu0 0.0
    %971 = vmatprep.subr.mxu0 0.0
    %972 = vmatpush1.msra.mxu0 0.0
    %973 = vmatprep.subr.mxu0 0.0
    %974 = vmatpush1.msra.mxu0 0.0
    %975 = vmatprep.subr.mxu0 0.0
    %976 = vmatpush1.msra.mxu0 0.0
    %977 = vmatprep.subr.mxu0 0.0
    %978 = vmatpush1.msra.mxu0 0.0
    %979 = vmatprep.mubr.f32.mxu0 0.0
    %980 = vmatmul.mubr.f32.gmra.mrb[0].mxu0 %v842
    %v981 = vpop.f32.mrb[0].mxu0
    %v982 = vadd.f32 0.0, %v981
    %v983 = vpop.f32.mrb[0].mxu0
    %v984 = vadd.f32 0.0, %v983
    %985 = vdwg.mxu0
    %v990 = vrot.slane %v911, 4
    %v991 = vrot.slane %v913, 4
    %v992 = vrot.slane %v982, 4
    %v993 = vrot.slane %v984, 4
    %v998 = vadd.f32 %v280, %v990
    %v999 = vadd.f32 %v282, %v991
    %v1000 = vadd.f32 %v357, %v992
    %v1001 = vadd.f32 %v359, %v993
    %v1002 = vxor.u32 %v998, 2147483648
    %v1003 = vxor.u32 %v999, 2147483648
    %v1004 = vxor.u32 %v1000, 2147483648
    %v1005 = vmul.f32 %v1002, 1.442695
    %v1006 = vpow.pop %v1005
    %v1007 = vmul.f32 %v1003, 1.442695
    %v1008 = vpow.pop %v1007
    %v1009 = vmul.f32 %v1004, 1.442695
    %v1010 = vpow.pop %v1009
    %v1011 = vadd.f32 %v1006, 1.0
    %v1012 = vadd.f32 %v1008, 1.0
    %v1013 = vadd.f32 %v1010, 1.0
    %v1014 = vrcp.pop %v1011
    %v1015 = vmul.f32 1.0, %v1014
    %v1016 = vrcp.pop %v1012
    %v1017 = vmul.f32 1.0, %v1016
    %v1018 = vrcp.pop %v1013
    %v1019 = vmul.f32 1.0, %v1018
    %v1020 = vtanh.pop %v1001
    %v1022 = vrot.slane %v810, 6
    %v1024 = vmul.f32 %v1017, %v1022
    %v1025 = vmul.f32 %v1015, %v1020
    %v1026 = vadd.f32 %v1024, %v1025
    %v1027 = vtanh.pop %v1026
    %v1028 = vmul.f32 %v1019, %v1027
    %v1030 = vcombine.high %v1028, %v1028
    %v1032 = vunpack.c.l.s4 1966171168
    %v1033 = vunpack.c.0.s8 %v1032
    %v1034 = vlaneseq
    %v1035 = vshrl.u32 %v1034, 7
    %v1036 = vsub.s32 %v1033, %v1035
    %v1037 = vrot.slane %v1030, %v1036
    %v1038 = vcombine.high %v1037, %v1037
    %v1040 = vunpack.c.l.s4 1966171168
    %v1041 = vunpack.c.0.s8 %v1040
    %v1042 = vlaneseq
    %v1043 = vshrl.u32 %v1042, 7
    %v1044 = vsub.s32 %v1041, %v1043
    %v1045 = vrot.slane %v1037, %v1044
    %v1047 = vunpack.c.l.s4 1966171168
    %v1048 = vunpack.c.0.s8 %v1047
    %v1049 = vlaneseq
    %v1050 = vshrl.u32 %v1049, 7
    %v1051 = vsub.s32 %v1048, %v1050
    %v1052 = vrot.slane %v1038, %v1051
    %1055 = vst [vmem:[#allocation8 + $0x2] sm:$0x1] %v1045
    %1056 = vst [vmem:[#allocation8 + $0xa] sm:$0x1] %v1052
    %v1057 = vrot.slane %v1028, 4
    %1059 = vmatprep.subr.mxu0 %v368
    %1060 = vmatpush1.msra.mxu0 %v367
    %1061 = vmatprep.subr.mxu0 %v372
    %1062 = vmatpush1.msra.mxu0 %v371
    %1063 = vmatprep.subr.mxu0 %v376
    %1064 = vmatpush1.msra.mxu0 %v375
    %1065 = vmatprep.subr.mxu0 %v380
    %1066 = vmatpush1.msra.mxu0 %v379
    %1067 = vmatprep.subr.mxu0 %v384
    %1068 = vmatpush1.msra.mxu0 %v383
    %1069 = vmatprep.subr.mxu0 %v388
    %1070 = vmatpush1.msra.mxu0 %v387
    %1071 = vmatprep.subr.mxu0 %v392
    %1072 = vmatpush1.msra.mxu0 %v391
    %1073 = vmatprep.subr.mxu0 %v396
    %1074 = vmatpush1.msra.mxu0 %v395
    %1075 = vmatprep.subr.mxu0 %v400
    %1076 = vmatpush1.msra.mxu0 %v399
    %1077 = vmatprep.subr.mxu0 %v404
    %1078 = vmatpush1.msra.mxu0 %v403
    %1079 = vmatprep.subr.mxu0 %v408
    %1080 = vmatpush1.msra.mxu0 %v407
    %1081 = vmatprep.subr.mxu0 %v412
    %1082 = vmatpush1.msra.mxu0 %v411
    %1083 = vmatprep.subr.mxu0 %v416
    %1084 = vmatpush1.msra.mxu0 %v415
    %1085 = vmatprep.subr.mxu0 %v420
    %1086 = vmatpush1.msra.mxu0 %v419
    %1087 = vmatprep.subr.mxu0 %v424
    %1088 = vmatpush1.msra.mxu0 %v423
    %1089 = vmatprep.subr.mxu0 %v428
    %1090 = vmatpush1.msra.mxu0 %v427
    %1091 = vmatprep.subr.mxu0 0.0
    %1092 = vmatpush1.msra.mxu0 0.0
    %1093 = vmatprep.subr.mxu0 0.0
    %1094 = vmatpush1.msra.mxu0 0.0
    %1095 = vmatprep.subr.mxu0 0.0
    %1096 = vmatpush1.msra.mxu0 0.0
    %1097 = vmatprep.subr.mxu0 0.0
    %1098 = vmatpush1.msra.mxu0 0.0
    %1099 = vmatprep.subr.mxu0 0.0
    %1100 = vmatpush1.msra.mxu0 0.0
    %1101 = vmatprep.subr.mxu0 0.0
    %1102 = vmatpush1.msra.mxu0 0.0
    %1103 = vmatprep.subr.mxu0 0.0
    %1104 = vmatpush1.msra.mxu0 0.0
    %1105 = vmatprep.subr.mxu0 0.0
    %1106 = vmatpush1.msra.mxu0 0.0
    %1107 = vmatprep.subr.mxu0 0.0
    %1108 = vmatpush1.msra.mxu0 0.0
    %1109 = vmatprep.subr.mxu0 0.0
    %1110 = vmatpush1.msra.mxu0 0.0
    %1111 = vmatprep.subr.mxu0 0.0
    %1112 = vmatpush1.msra.mxu0 0.0
    %1113 = vmatprep.subr.mxu0 0.0
    %1114 = vmatpush1.msra.mxu0 0.0
    %1115 = vmatprep.subr.mxu0 0.0
    %1116 = vmatpush1.msra.mxu0 0.0
    %1117 = vmatprep.subr.mxu0 0.0
    %1118 = vmatpush1.msra.mxu0 0.0
    %1119 = vmatprep.subr.mxu0 0.0
    %1120 = vmatpush1.msra.mxu0 0.0
    %1121 = vmatprep.subr.mxu0 0.0
    %1122 = vmatpush1.msra.mxu0 0.0
    %1123 = vmatprep.mubr.f32.mxu0 0.0
    %1124 = vmatmul.mubr.f32.gmra.mrb[0].mxu0 %v1057
    %v1125 = vpop.f32.mrb[0].mxu0
    %v1126 = vadd.f32 0.0, %v1125
    %v1127 = vpop.f32.mrb[0].mxu0
    %v1128 = vadd.f32 0.0, %v1127
    %1129 = vdwg.mxu0
    %1130 = vmatprep.subr.mxu0 %v370
    %1131 = vmatpush1.msra.mxu0 %v369
    %1132 = vmatprep.subr.mxu0 %v374
    %1133 = vmatpush1.msra.mxu0 %v373
    %1134 = vmatprep.subr.mxu0 %v378
    %1135 = vmatpush1.msra.mxu0 %v377
    %1136 = vmatprep.subr.mxu0 %v382
    %1137 = vmatpush1.msra.mxu0 %v381
    %1138 = vmatprep.subr.mxu0 %v386
    %1139 = vmatpush1.msra.mxu0 %v385
    %1140 = vmatprep.subr.mxu0 %v390
    %1141 = vmatpush1.msra.mxu0 %v389
    %1142 = vmatprep.subr.mxu0 %v394
    %1143 = vmatpush1.msra.mxu0 %v393
    %1144 = vmatprep.subr.mxu0 %v398
    %1145 = vmatpush1.msra.mxu0 %v397
    %1146 = vmatprep.subr.mxu0 %v402
    %1147 = vmatpush1.msra.mxu0 %v401
    %1148 = vmatprep.subr.mxu0 %v406
    %1149 = vmatpush1.msra.mxu0 %v405
    %1150 = vmatprep.subr.mxu0 %v410
    %1151 = vmatpush1.msra.mxu0 %v409
    %1152 = vmatprep.subr.mxu0 %v414
    %1153 = vmatpush1.msra.mxu0 %v413
    %1154 = vmatprep.subr.mxu0 %v418
    %1155 = vmatpush1.msra.mxu0 %v417
    %1156 = vmatprep.subr.mxu0 %v422
    %1157 = vmatpush1.msra.mxu0 %v421
    %1158 = vmatprep.subr.mxu0 %v426
    %1159 = vmatpush1.msra.mxu0 %v425
    %1160 = vmatprep.subr.mxu0 %v430
    %1161 = vmatpush1.msra.mxu0 %v429
    %1162 = vmatprep.subr.mxu0 0.0
    %1163 = vmatpush1.msra.mxu0 0.0
    %1164 = vmatprep.subr.mxu0 0.0
    %1165 = vmatpush1.msra.mxu0 0.0
    %1166 = vmatprep.subr.mxu0 0.0
    %1167 = vmatpush1.msra.mxu0 0.0
    %1168 = vmatprep.subr.mxu0 0.0
    %1169 = vmatpush1.msra.mxu0 0.0
    %1170 = vmatprep.subr.mxu0 0.0
    %1171 = vmatpush1.msra.mxu0 0.0
    %1172 = vmatprep.subr.mxu0 0.0
    %1173 = vmatpush1.msra.mxu0 0.0
    %1174 = vmatprep.subr.mxu0 0.0
    %1175 = vmatpush1.msra.mxu0 0.0
    %1176 = vmatprep.subr.mxu0 0.0
    %1177 = vmatpush1.msra.mxu0 0.0
    %1178 = vmatprep.subr.mxu0 0.0
    %1179 = vmatpush1.msra.mxu0 0.0
    %1180 = vmatprep.subr.mxu0 0.0
    %1181 = vmatpush1.msra.mxu0 0.0
    %1182 = vmatprep.subr.mxu0 0.0
    %1183 = vmatpush1.msra.mxu0 0.0
    %1184 = vmatprep.subr.mxu0 0.0
    %1185 = vmatpush1.msra.mxu0 0.0
    %1186 = vmatprep.subr.mxu0 0.0
    %1187 = vmatpush1.msra.mxu0 0.0
    %1188 = vmatprep.subr.mxu0 0.0
    %1189 = vmatpush1.msra.mxu0 0.0
    %1190 = vmatprep.subr.mxu0 0.0
    %1191 = vmatpush1.msra.mxu0 0.0
    %1192 = vmatprep.subr.mxu0 0.0
    %1193 = vmatpush1.msra.mxu0 0.0
    %1194 = vmatprep.mubr.f32.mxu0 0.0
    %1195 = vmatmul.mubr.f32.gmra.mrb[0].mxu0 %v1057
    %v1196 = vpop.f32.mrb[0].mxu0
    %v1197 = vadd.f32 0.0, %v1196
    %v1198 = vpop.f32.mrb[0].mxu0
    %v1199 = vadd.f32 0.0, %v1198
    %1200 = vdwg.mxu0
    %v1205 = vrot.slane %v1126, 2
    %v1206 = vrot.slane %v1128, 2
    %v1207 = vrot.slane %v1197, 2
    %v1208 = vrot.slane %v1199, 2
    %v1213 = vadd.f32 %v280, %v1205
    %v1214 = vadd.f32 %v282, %v1206
    %v1215 = vadd.f32 %v357, %v1207
    %v1216 = vadd.f32 %v359, %v1208
    %v1217 = vxor.u32 %v1213, 2147483648
    %v1218 = vxor.u32 %v1214, 2147483648
    %v1219 = vxor.u32 %v1215, 2147483648
    %v1220 = vmul.f32 %v1217, 1.442695
    %v1221 = vpow.pop %v1220
    %v1222 = vmul.f32 %v1218, 1.442695
    %v1223 = vpow.pop %v1222
    %v1224 = vmul.f32 %v1219, 1.442695
    %v1225 = vpow.pop %v1224
    %v1226 = vadd.f32 %v1221, 1.0
    %v1227 = vadd.f32 %v1223, 1.0
    %v1228 = vadd.f32 %v1225, 1.0
    %v1229 = vrcp.pop %v1226
    %v1230 = vmul.f32 1.0, %v1229
    %v1231 = vrcp.pop %v1227
    %v1232 = vmul.f32 1.0, %v1231
    %v1233 = vrcp.pop %v1228
    %v1234 = vmul.f32 1.0, %v1233
    %v1235 = vtanh.pop %v1216
    %v1237 = vrot.slane %v1026, 6
    %v1239 = vmul.f32 %v1232, %v1237
    %v1240 = vmul.f32 %v1230, %v1235
    %v1241 = vadd.f32 %v1239, %v1240
    %v1242 = vtanh.pop %v1241
    %v1243 = vmul.f32 %v1234, %v1242
    %v1245 = vcombine.high %v1243, %v1243
    %v1247 = vunpack.c.l.s4 1966171168
    %v1248 = vunpack.c.0.s8 %v1247
    %v1249 = vlaneseq
    %v1250 = vshrl.u32 %v1249, 7
    %v1251 = vsub.s32 %v1248, %v1250
    %v1252 = vrot.slane %v1245, %v1251
    %v1253 = vcombine.high %v1252, %v1252
    %v1255 = vunpack.c.l.s4 1966171168
    %v1256 = vunpack.c.0.s8 %v1255
    %v1257 = vlaneseq
    %v1258 = vshrl.u32 %v1257, 7
    %v1259 = vsub.s32 %v1256, %v1258
    %v1260 = vrot.slane %v1252, %v1259
    %v1262 = vunpack.c.l.s4 1966171168
    %v1263 = vunpack.c.0.s8 %v1262
    %v1264 = vlaneseq
    %v1265 = vshrl.u32 %v1264, 7
    %v1266 = vsub.s32 %v1263, %v1265
    %v1267 = vrot.slane %v1253, %v1266
    %v1268 = vcombine.high %v1260, %v1260
    %v1269 = vcombine.high %v1267, %v1267
    %1272 = vst [vmem:[#allocation8 + $0x3] sm:$0x1] %v1268
    %1273 = vst [vmem:[#allocation8 + $0xb] sm:$0x1] %v1269
    %v1274 = vrot.slane %v1243, 6
    %1276 = vmatprep.subr.mxu0 %v368
    %1277 = vmatpush1.msra.mxu0 %v367
    %1278 = vmatprep.subr.mxu0 %v372
    %1279 = vmatpush1.msra.mxu0 %v371
    %1280 = vmatprep.subr.mxu0 %v376
    %1281 = vmatpush1.msra.mxu0 %v375
    %1282 = vmatprep.subr.mxu0 %v380
    %1283 = vmatpush1.msra.mxu0 %v379
    %1284 = vmatprep.subr.mxu0 %v384
    %1285 = vmatpush1.msra.mxu0 %v383
    %1286 = vmatprep.subr.mxu0 %v388
    %1287 = vmatpush1.msra.mxu0 %v387
    %1288 = vmatprep.subr.mxu0 %v392
    %1289 = vmatpush1.msra.mxu0 %v391
    %1290 = vmatprep.subr.mxu0 %v396
    %1291 = vmatpush1.msra.mxu0 %v395
    %1292 = vmatprep.subr.mxu0 %v400
    %1293 = vmatpush1.msra.mxu0 %v399
    %1294 = vmatprep.subr.mxu0 %v404
    %1295 = vmatpush1.msra.mxu0 %v403
    %1296 = vmatprep.subr.mxu0 %v408
    %1297 = vmatpush1.msra.mxu0 %v407
    %1298 = vmatprep.subr.mxu0 %v412
    %1299 = vmatpush1.msra.mxu0 %v411
    %1300 = vmatprep.subr.mxu0 %v416
    %1301 = vmatpush1.msra.mxu0 %v415
    %1302 = vmatprep.subr.mxu0 %v420
    %1303 = vmatpush1.msra.mxu0 %v419
    %1304 = vmatprep.subr.mxu0 %v424
    %1305 = vmatpush1.msra.mxu0 %v423
    %1306 = vmatprep.subr.mxu0 %v428
    %1307 = vmatpush1.msra.mxu0 %v427
    %1308 = vmatprep.subr.mxu0 0.0
    %1309 = vmatpush1.msra.mxu0 0.0
    %1310 = vmatprep.subr.mxu0 0.0
    %1311 = vmatpush1.msra.mxu0 0.0
    %1312 = vmatprep.subr.mxu0 0.0
    %1313 = vmatpush1.msra.mxu0 0.0
    %1314 = vmatprep.subr.mxu0 0.0
    %1315 = vmatpush1.msra.mxu0 0.0
    %1316 = vmatprep.subr.mxu0 0.0
    %1317 = vmatpush1.msra.mxu0 0.0
    %1318 = vmatprep.subr.mxu0 0.0
    %1319 = vmatpush1.msra.mxu0 0.0
    %1320 = vmatprep.subr.mxu0 0.0
    %1321 = vmatpush1.msra.mxu0 0.0
    %1322 = vmatprep.subr.mxu0 0.0
    %1323 = vmatpush1.msra.mxu0 0.0
    %1324 = vmatprep.subr.mxu0 0.0
    %1325 = vmatpush1.msra.mxu0 0.0
    %1326 = vmatprep.subr.mxu0 0.0
    %1327 = vmatpush1.msra.mxu0 0.0
    %1328 = vmatprep.subr.mxu0 0.0
    %1329 = vmatpush1.msra.mxu0 0.0
    %1330 = vmatprep.subr.mxu0 0.0
    %1331 = vmatpush1.msra.mxu0 0.0
    %1332 = vmatprep.subr.mxu0 0.0
    %1333 = vmatpush1.msra.mxu0 0.0
    %1334 = vmatprep.subr.mxu0 0.0
    %1335 = vmatpush1.msra.mxu0 0.0
    %1336 = vmatprep.subr.mxu0 0.0
    %1337 = vmatpush1.msra.mxu0 0.0
    %1338 = vmatprep.subr.mxu0 0.0
    %1339 = vmatpush1.msra.mxu0 0.0
    %1340 = vmatprep.mubr.f32.mxu0 0.0
    %1341 = vmatmul.mubr.f32.gmra.mrb[0].mxu0 %v1274
    %v1342 = vpop.f32.mrb[0].mxu0
    %v1343 = vadd.f32 0.0, %v1342
    %v1344 = vpop.f32.mrb[0].mxu0
    %v1345 = vadd.f32 0.0, %v1344
    %1346 = vdwg.mxu0
    %1347 = vmatprep.subr.mxu0 %v370
    %1348 = vmatpush1.msra.mxu0 %v369
    %1349 = vmatprep.subr.mxu0 %v374
    %1350 = vmatpush1.msra.mxu0 %v373
    %1351 = vmatprep.subr.mxu0 %v378
    %1352 = vmatpush1.msra.mxu0 %v377
    %1353 = vmatprep.subr.mxu0 %v382
    %1354 = vmatpush1.msra.mxu0 %v381
    %1355 = vmatprep.subr.mxu0 %v386
    %1356 = vmatpush1.msra.mxu0 %v385
    %1357 = vmatprep.subr.mxu0 %v390
    %1358 = vmatpush1.msra.mxu0 %v389
    %1359 = vmatprep.subr.mxu0 %v394
    %1360 = vmatpush1.msra.mxu0 %v393
    %1361 = vmatprep.subr.mxu0 %v398
    %1362 = vmatpush1.msra.mxu0 %v397
    %1363 = vmatprep.subr.mxu0 %v402
    %1364 = vmatpush1.msra.mxu0 %v401
    %1365 = vmatprep.subr.mxu0 %v406
    %1366 = vmatpush1.msra.mxu0 %v405
    %1367 = vmatprep.subr.mxu0 %v410
    %1368 = vmatpush1.msra.mxu0 %v409
    %1369 = vmatprep.subr.mxu0 %v414
    %1370 = vmatpush1.msra.mxu0 %v413
    %1371 = vmatprep.subr.mxu0 %v418
    %1372 = vmatpush1.msra.mxu0 %v417
    %1373 = vmatprep.subr.mxu0 %v422
    %1374 = vmatpush1.msra.mxu0 %v421
    %1375 = vmatprep.subr.mxu0 %v426
    %1376 = vmatpush1.msra.mxu0 %v425
    %1377 = vmatprep.subr.mxu0 %v430
    %1378 = vmatpush1.msra.mxu0 %v429
    %1379 = vmatprep.subr.mxu0 0.0
    %1380 = vmatpush1.msra.mxu0 0.0
    %1381 = vmatprep.subr.mxu0 0.0
    %1382 = vmatpush1.msra.mxu0 0.0
    %1383 = vmatprep.subr.mxu0 0.0
    %1384 = vmatpush1.msra.mxu0 0.0
    %1385 = vmatprep.subr.mxu0 0.0
    %1386 = vmatpush1.msra.mxu0 0.0
    %1387 = vmatprep.subr.mxu0 0.0
    %1388 = vmatpush1.msra.mxu0 0.0
    %1389 = vmatprep.subr.mxu0 0.0
    %1390 = vmatpush1.msra.mxu0 0.0
    %1391 = vmatprep.subr.mxu0 0.0
    %1392 = vmatpush1.msra.mxu0 0.0
    %1393 = vmatprep.subr.mxu0 0.0
    %1394 = vmatpush1.msra.mxu0 0.0
    %1395 = vmatprep.subr.mxu0 0.0
    %1396 = vmatpush1.msra.mxu0 0.0
    %1397 = vmatprep.subr.mxu0 0.0
    %1398 = vmatpush1.msra.mxu0 0.0
    %1399 = vmatprep.subr.mxu0 0.0
    %1400 = vmatpush1.msra.mxu0 0.0
    %1401 = vmatprep.subr.mxu0 0.0
    %1402 = vmatpush1.msra.mxu0 0.0
    %1403 = vmatprep.subr.mxu0 0.0
    %1404 = vmatpush1.msra.mxu0 0.0
    %1405 = vmatprep.subr.mxu0 0.0
    %1406 = vmatpush1.msra.mxu0 0.0
    %1407 = vmatprep.subr.mxu0 0.0
    %1408 = vmatpush1.msra.mxu0 0.0
    %1409 = vmatprep.subr.mxu0 0.0
    %1410 = vmatpush1.msra.mxu0 0.0
    %1411 = vmatprep.mubr.f32.mxu0 0.0
    %1412 = vmatmul.mubr.f32.gmra.mrb[0].mxu0 %v1274
    %v1413 = vpop.f32.mrb[0].mxu0
    %v1414 = vadd.f32 0.0, %v1413
    %v1415 = vpop.f32.mrb[0].mxu0
    %v1416 = vadd.f32 0.0, %v1415
    %1417 = vdwg.mxu0
    %v1418 = vadd.f32 %v286, %v1343
    %v1419 = vadd.f32 %v288, %v1345
    %v1420 = vadd.f32 %v363, %v1414
    %v1421 = vadd.f32 %v365, %v1416
    %v1422 = vxor.u32 %v1418, 2147483648
    %v1423 = vxor.u32 %v1419, 2147483648
    %v1424 = vxor.u32 %v1420, 2147483648
    %v1425 = vmul.f32 %v1422, 1.442695
    %v1426 = vpow.pop %v1425
    %v1427 = vmul.f32 %v1423, 1.442695
    %v1428 = vpow.pop %v1427
    %v1429 = vmul.f32 %v1424, 1.442695
    %v1430 = vpow.pop %v1429
    %v1431 = vadd.f32 %v1426, 1.0
    %v1432 = vadd.f32 %v1428, 1.0
    %v1433 = vadd.f32 %v1430, 1.0
    %v1434 = vrcp.pop %v1431
    %v1435 = vmul.f32 1.0, %v1434
    %v1436 = vrcp.pop %v1432
    %v1437 = vmul.f32 1.0, %v1436
    %v1438 = vrcp.pop %v1433
    %v1439 = vmul.f32 1.0, %v1438
    %v1440 = vtanh.pop %v1421
    %v1442 = vrot.slane %v1241, 6
    %v1444 = vmul.f32 %v1437, %v1442
    %v1445 = vmul.f32 %v1435, %v1440
    %v1446 = vadd.f32 %v1444, %v1445
    %v1447 = vtanh.pop %v1446
    %v1448 = vmul.f32 %v1439, %v1447
    %v1451 = vunpack.c.l.s4 1966171168
    %v1452 = vunpack.c.0.s8 %v1451
    %v1453 = vlaneseq
    %v1454 = vshrl.u32 %v1453, 7
    %v1455 = vsub.s32 %v1452, %v1454
    %v1456 = vrot.slane %v1448, %v1455
    %v1457 = vcombine.high %v1456, %v1456
    %v1459 = vunpack.c.l.s4 1966171168
    %v1460 = vunpack.c.0.s8 %v1459
    %v1461 = vlaneseq
    %v1462 = vshrl.u32 %v1461, 7
    %v1463 = vsub.s32 %v1460, %v1462
    %v1464 = vrot.slane %v1456, %v1463
    %v1466 = vunpack.c.l.s4 1966171168
    %v1467 = vunpack.c.0.s8 %v1466
    %v1468 = vlaneseq
    %v1469 = vshrl.u32 %v1468, 7
    %v1470 = vsub.s32 %v1467, %v1469
    %v1471 = vrot.slane %v1457, %v1470
    %1474 = vst [vmem:[#allocation8 + $0x4] sm:$0x1] %v1464
    %1475 = vst [vmem:[#allocation8 + $0xc] sm:$0x1] %v1471
    %1476 = vmatprep.subr.mxu0 %v368
    %1477 = vmatpush1.msra.mxu0 %v367
    %1478 = vmatprep.subr.mxu0 %v372
    %1479 = vmatpush1.msra.mxu0 %v371
    %1480 = vmatprep.subr.mxu0 %v376
    %1481 = vmatpush1.msra.mxu0 %v375
    %1482 = vmatprep.subr.mxu0 %v380
    %1483 = vmatpush1.msra.mxu0 %v379
    %1484 = vmatprep.subr.mxu0 %v384
    %1485 = vmatpush1.msra.mxu0 %v383
    %1486 = vmatprep.subr.mxu0 %v388
    %1487 = vmatpush1.msra.mxu0 %v387
    %1488 = vmatprep.subr.mxu0 %v392
    %1489 = vmatpush1.msra.mxu0 %v391
    %1490 = vmatprep.subr.mxu0 %v396
    %1491 = vmatpush1.msra.mxu0 %v395
    %1492 = vmatprep.subr.mxu0 %v400
    %1493 = vmatpush1.msra.mxu0 %v399
    %1494 = vmatprep.subr.mxu0 %v404
    %1495 = vmatpush1.msra.mxu0 %v403
    %1496 = vmatprep.subr.mxu0 %v408
    %1497 = vmatpush1.msra.mxu0 %v407
    %1498 = vmatprep.subr.mxu0 %v412
    %1499 = vmatpush1.msra.mxu0 %v411
    %1500 = vmatprep.subr.mxu0 %v416
    %1501 = vmatpush1.msra.mxu0 %v415
    %1502 = vmatprep.subr.mxu0 %v420
    %1503 = vmatpush1.msra.mxu0 %v419
    %1504 = vmatprep.subr.mxu0 %v424
    %1505 = vmatpush1.msra.mxu0 %v423
    %1506 = vmatprep.subr.mxu0 %v428
    %1507 = vmatpush1.msra.mxu0 %v427
    %1508 = vmatprep.subr.mxu0 0.0
    %1509 = vmatpush1.msra.mxu0 0.0
    %1510 = vmatprep.subr.mxu0 0.0
    %1511 = vmatpush1.msra.mxu0 0.0
    %1512 = vmatprep.subr.mxu0 0.0
    %1513 = vmatpush1.msra.mxu0 0.0
    %1514 = vmatprep.subr.mxu0 0.0
    %1515 = vmatpush1.msra.mxu0 0.0
    %1516 = vmatprep.subr.mxu0 0.0
    %1517 = vmatpush1.msra.mxu0 0.0
    %1518 = vmatprep.subr.mxu0 0.0
    %1519 = vmatpush1.msra.mxu0 0.0
    %1520 = vmatprep.subr.mxu0 0.0
    %1521 = vmatpush1.msra.mxu0 0.0
    %1522 = vmatprep.subr.mxu0 0.0
    %1523 = vmatpush1.msra.mxu0 0.0
    %1524 = vmatprep.subr.mxu0 0.0
    %1525 = vmatpush1.msra.mxu0 0.0
    %1526 = vmatprep.subr.mxu0 0.0
    %1527 = vmatpush1.msra.mxu0 0.0
    %1528 = vmatprep.subr.mxu0 0.0
    %1529 = vmatpush1.msra.mxu0 0.0
    %1530 = vmatprep.subr.mxu0 0.0
    %1531 = vmatpush1.msra.mxu0 0.0
    %1532 = vmatprep.subr.mxu0 0.0
    %1533 = vmatpush1.msra.mxu0 0.0
    %1534 = vmatprep.subr.mxu0 0.0
    %1535 = vmatpush1.msra.mxu0 0.0
    %1536 = vmatprep.subr.mxu0 0.0
    %1537 = vmatpush1.msra.mxu0 0.0
    %1538 = vmatprep.subr.mxu0 0.0
    %1539 = vmatpush1.msra.mxu0 0.0
    %1540 = vmatprep.mubr.f32.mxu0 0.0
    %1541 = vmatmul.mubr.f32.gmra.mrb[0].mxu0 %v1448
    %v1542 = vpop.f32.mrb[0].mxu0
    %v1543 = vadd.f32 0.0, %v1542
    %v1544 = vpop.f32.mrb[0].mxu0
    %v1545 = vadd.f32 0.0, %v1544
    %1546 = vdwg.mxu0
    %1547 = vmatprep.subr.mxu0 %v370
    %1548 = vmatpush1.msra.mxu0 %v369
    %1549 = vmatprep.subr.mxu0 %v374
    %1550 = vmatpush1.msra.mxu0 %v373
    %1551 = vmatprep.subr.mxu0 %v378
    %1552 = vmatpush1.msra.mxu0 %v377
    %1553 = vmatprep.subr.mxu0 %v382
    %1554 = vmatpush1.msra.mxu0 %v381
    %1555 = vmatprep.subr.mxu0 %v386
    %1556 = vmatpush1.msra.mxu0 %v385
    %1557 = vmatprep.subr.mxu0 %v390
    %1558 = vmatpush1.msra.mxu0 %v389
    %1559 = vmatprep.subr.mxu0 %v394
    %1560 = vmatpush1.msra.mxu0 %v393
    %1561 = vmatprep.subr.mxu0 %v398
    %1562 = vmatpush1.msra.mxu0 %v397
    %1563 = vmatprep.subr.mxu0 %v402
    %1564 = vmatpush1.msra.mxu0 %v401
    %1565 = vmatprep.subr.mxu0 %v406
    %1566 = vmatpush1.msra.mxu0 %v405
    %1567 = vmatprep.subr.mxu0 %v410
    %1568 = vmatpush1.msra.mxu0 %v409
    %1569 = vmatprep.subr.mxu0 %v414
    %1570 = vmatpush1.msra.mxu0 %v413
    %1571 = vmatprep.subr.mxu0 %v418
    %1572 = vmatpush1.msra.mxu0 %v417
    %1573 = vmatprep.subr.mxu0 %v422
    %1574 = vmatpush1.msra.mxu0 %v421
    %1575 = vmatprep.subr.mxu0 %v426
    %1576 = vmatpush1.msra.mxu0 %v425
    %1577 = vmatprep.subr.mxu0 %v430
    %1578 = vmatpush1.msra.mxu0 %v429
    %1579 = vmatprep.subr.mxu0 0.0
    %1580 = vmatpush1.msra.mxu0 0.0
    %1581 = vmatprep.subr.mxu0 0.0
    %1582 = vmatpush1.msra.mxu0 0.0
    %1583 = vmatprep.subr.mxu0 0.0
    %1584 = vmatpush1.msra.mxu0 0.0
    %1585 = vmatprep.subr.mxu0 0.0
    %1586 = vmatpush1.msra.mxu0 0.0
    %1587 = vmatprep.subr.mxu0 0.0
    %1588 = vmatpush1.msra.mxu0 0.0
    %1589 = vmatprep.subr.mxu0 0.0
    %1590 = vmatpush1.msra.mxu0 0.0
    %1591 = vmatprep.subr.mxu0 0.0
    %1592 = vmatpush1.msra.mxu0 0.0
    %1593 = vmatprep.subr.mxu0 0.0
    %1594 = vmatpush1.msra.mxu0 0.0
    %1595 = vmatprep.subr.mxu0 0.0
    %1596 = vmatpush1.msra.mxu0 0.0
    %1597 = vmatprep.subr.mxu0 0.0
    %1598 = vmatpush1.msra.mxu0 0.0
    %1599 = vmatprep.subr.mxu0 0.0
    %1600 = vmatpush1.msra.mxu0 0.0
    %1601 = vmatprep.subr.mxu0 0.0
    %1602 = vmatpush1.msra.mxu0 0.0
    %1603 = vmatprep.subr.mxu0 0.0
    %1604 = vmatpush1.msra.mxu0 0.0
    %1605 = vmatprep.subr.mxu0 0.0
    %1606 = vmatpush1.msra.mxu0 0.0
    %1607 = vmatprep.subr.mxu0 0.0
    %1608 = vmatpush1.msra.mxu0 0.0
    %1609 = vmatprep.subr.mxu0 0.0
    %1610 = vmatpush1.msra.mxu0 0.0
    %1611 = vmatprep.mubr.f32.mxu0 0.0
    %1612 = vmatmul.mubr.f32.gmra.mrb[0].mxu0 %v1448
    %v1613 = vpop.f32.mrb[0].mxu0
    %v1614 = vadd.f32 0.0, %v1613
    %v1615 = vpop.f32.mrb[0].mxu0
    %v1616 = vadd.f32 0.0, %v1615
    %1617 = vdwg.mxu0
    %v1622 = vrot.slane %v1543, 6
    %v1623 = vrot.slane %v1545, 6
    %v1624 = vrot.slane %v1614, 6
    %v1625 = vrot.slane %v1616, 6
    %v1630 = vadd.f32 %v286, %v1622
    %v1631 = vadd.f32 %v288, %v1623
    %v1632 = vadd.f32 %v363, %v1624
    %v1633 = vadd.f32 %v365, %v1625
    %v1634 = vxor.u32 %v1630, 2147483648
    %v1635 = vxor.u32 %v1631, 2147483648
    %v1636 = vxor.u32 %v1632, 2147483648
    %v1637 = vmul.f32 %v1634, 1.442695
    %v1638 = vpow.pop %v1637
    %v1639 = vmul.f32 %v1635, 1.442695
    %v1640 = vpow.pop %v1639
    %v1641 = vmul.f32 %v1636, 1.442695
    %v1642 = vpow.pop %v1641
    %v1643 = vadd.f32 %v1638, 1.0
    %v1644 = vadd.f32 %v1640, 1.0
    %v1645 = vadd.f32 %v1642, 1.0
    %v1646 = vrcp.pop %v1643
    %v1647 = vmul.f32 1.0, %v1646
    %v1648 = vrcp.pop %v1644
    %v1649 = vmul.f32 1.0, %v1648
    %v1650 = vrcp.pop %v1645
    %v1651 = vmul.f32 1.0, %v1650
    %v1652 = vtanh.pop %v1633
    %v1654 = vrot.slane %v1446, 6
    %v1656 = vmul.f32 %v1649, %v1654
    %v1657 = vmul.f32 %v1647, %v1652
    %v1658 = vadd.f32 %v1656, %v1657
    %v1659 = vtanh.pop %v1658
    %v1660 = vmul.f32 %v1651, %v1659
    %v1663 = vunpack.c.l.s4 1966171168
    %v1664 = vunpack.c.0.s8 %v1663
    %v1665 = vlaneseq
    %v1666 = vshrl.u32 %v1665, 7
    %v1667 = vsub.s32 %v1664, %v1666
    %v1668 = vrot.slane %v1660, %v1667
    %v1669 = vcombine.high %v1668, %v1668
    %v1671 = vunpack.c.l.s4 1966171168
    %v1672 = vunpack.c.0.s8 %v1671
    %v1673 = vlaneseq
    %v1674 = vshrl.u32 %v1673, 7
    %v1675 = vsub.s32 %v1672, %v1674
    %v1676 = vrot.slane %v1668, %v1675
    %v1678 = vunpack.c.l.s4 1966171168
    %v1679 = vunpack.c.0.s8 %v1678
    %v1680 = vlaneseq
    %v1681 = vshrl.u32 %v1680, 7
    %v1682 = vsub.s32 %v1679, %v1681
    %v1683 = vrot.slane %v1669, %v1682
    %v1684 = vcombine.high %v1676, %v1676
    %v1685 = vcombine.high %v1683, %v1683
    %1688 = vst [vmem:[#allocation8 + $0x5] sm:$0x1] %v1684
    %1689 = vst [vmem:[#allocation8 + $0xd] sm:$0x1] %v1685
    %v1690 = vrot.slane %v1660, 2
    %1692 = vmatprep.subr.mxu0 %v368
    %1693 = vmatpush1.msra.mxu0 %v367
    %1694 = vmatprep.subr.mxu0 %v372
    %1695 = vmatpush1.msra.mxu0 %v371
    %1696 = vmatprep.subr.mxu0 %v376
    %1697 = vmatpush1.msra.mxu0 %v375
    %1698 = vmatprep.subr.mxu0 %v380
    %1699 = vmatpush1.msra.mxu0 %v379
    %1700 = vmatprep.subr.mxu0 %v384
    %1701 = vmatpush1.msra.mxu0 %v383
    %1702 = vmatprep.subr.mxu0 %v388
    %1703 = vmatpush1.msra.mxu0 %v387
    %1704 = vmatprep.subr.mxu0 %v392
    %1705 = vmatpush1.msra.mxu0 %v391
    %1706 = vmatprep.subr.mxu0 %v396
    %1707 = vmatpush1.msra.mxu0 %v395
    %1708 = vmatprep.subr.mxu0 %v400
    %1709 = vmatpush1.msra.mxu0 %v399
    %1710 = vmatprep.subr.mxu0 %v404
    %1711 = vmatpush1.msra.mxu0 %v403
    %1712 = vmatprep.subr.mxu0 %v408
    %1713 = vmatpush1.msra.mxu0 %v407
    %1714 = vmatprep.subr.mxu0 %v412
    %1715 = vmatpush1.msra.mxu0 %v411
    %1716 = vmatprep.subr.mxu0 %v416
    %1717 = vmatpush1.msra.mxu0 %v415
    %1718 = vmatprep.subr.mxu0 %v420
    %1719 = vmatpush1.msra.mxu0 %v419
    %1720 = vmatprep.subr.mxu0 %v424
    %1721 = vmatpush1.msra.mxu0 %v423
    %1722 = vmatprep.subr.mxu0 %v428
    %1723 = vmatpush1.msra.mxu0 %v427
    %1724 = vmatprep.subr.mxu0 0.0
    %1725 = vmatpush1.msra.mxu0 0.0
    %1726 = vmatprep.subr.mxu0 0.0
    %1727 = vmatpush1.msra.mxu0 0.0
    %1728 = vmatprep.subr.mxu0 0.0
    %1729 = vmatpush1.msra.mxu0 0.0
    %1730 = vmatprep.subr.mxu0 0.0
    %1731 = vmatpush1.msra.mxu0 0.0
    %1732 = vmatprep.subr.mxu0 0.0
    %1733 = vmatpush1.msra.mxu0 0.0
    %1734 = vmatprep.subr.mxu0 0.0
    %1735 = vmatpush1.msra.mxu0 0.0
    %1736 = vmatprep.subr.mxu0 0.0
    %1737 = vmatpush1.msra.mxu0 0.0
    %1738 = vmatprep.subr.mxu0 0.0
    %1739 = vmatpush1.msra.mxu0 0.0
    %1740 = vmatprep.subr.mxu0 0.0
    %1741 = vmatpush1.msra.mxu0 0.0
    %1742 = vmatprep.subr.mxu0 0.0
    %1743 = vmatpush1.msra.mxu0 0.0
    %1744 = vmatprep.subr.mxu0 0.0
    %1745 = vmatpush1.msra.mxu0 0.0
    %1746 = vmatprep.subr.mxu0 0.0
    %1747 = vmatpush1.msra.mxu0 0.0
    %1748 = vmatprep.subr.mxu0 0.0
    %1749 = vmatpush1.msra.mxu0 0.0
    %1750 = vmatprep.subr.mxu0 0.0
    %1751 = vmatpush1.msra.mxu0 0.0
    %1752 = vmatprep.subr.mxu0 0.0
    %1753 = vmatpush1.msra.mxu0 0.0
    %1754 = vmatprep.subr.mxu0 0.0
    %1755 = vmatpush1.msra.mxu0 0.0
    %1756 = vmatprep.mubr.f32.mxu0 0.0
    %1757 = vmatmul.mubr.f32.gmra.mrb[0].mxu0 %v1690
    %v1758 = vpop.f32.mrb[0].mxu0
    %v1759 = vadd.f32 0.0, %v1758
    %v1760 = vpop.f32.mrb[0].mxu0
    %v1761 = vadd.f32 0.0, %v1760
    %1762 = vdwg.mxu0
    %1763 = vmatprep.subr.mxu0 %v370
    %1764 = vmatpush1.msra.mxu0 %v369
    %1765 = vmatprep.subr.mxu0 %v374
    %1766 = vmatpush1.msra.mxu0 %v373
    %1767 = vmatprep.subr.mxu0 %v378
    %1768 = vmatpush1.msra.mxu0 %v377
    %1769 = vmatprep.subr.mxu0 %v382
    %1770 = vmatpush1.msra.mxu0 %v381
    %1771 = vmatprep.subr.mxu0 %v386
    %1772 = vmatpush1.msra.mxu0 %v385
    %1773 = vmatprep.subr.mxu0 %v390
    %1774 = vmatpush1.msra.mxu0 %v389
    %1775 = vmatprep.subr.mxu0 %v394
    %1776 = vmatpush1.msra.mxu0 %v393
    %1777 = vmatprep.subr.mxu0 %v398
    %1778 = vmatpush1.msra.mxu0 %v397
    %1779 = vmatprep.subr.mxu0 %v402
    %1780 = vmatpush1.msra.mxu0 %v401
    %1781 = vmatprep.subr.mxu0 %v406
    %1782 = vmatpush1.msra.mxu0 %v405
    %1783 = vmatprep.subr.mxu0 %v410
    %1784 = vmatpush1.msra.mxu0 %v409
    %1785 = vmatprep.subr.mxu0 %v414
    %1786 = vmatpush1.msra.mxu0 %v413
    %1787 = vmatprep.subr.mxu0 %v418
    %1788 = vmatpush1.msra.mxu0 %v417
    %1789 = vmatprep.subr.mxu0 %v422
    %1790 = vmatpush1.msra.mxu0 %v421
    %1791 = vmatprep.subr.mxu0 %v426
    %1792 = vmatpush1.msra.mxu0 %v425
    %1793 = vmatprep.subr.mxu0 %v430
    %1794 = vmatpush1.msra.mxu0 %v429
    %1795 = vmatprep.subr.mxu0 0.0
    %1796 = vmatpush1.msra.mxu0 0.0
    %1797 = vmatprep.subr.mxu0 0.0
    %1798 = vmatpush1.msra.mxu0 0.0
    %1799 = vmatprep.subr.mxu0 0.0
    %1800 = vmatpush1.msra.mxu0 0.0
    %1801 = vmatprep.subr.mxu0 0.0
    %1802 = vmatpush1.msra.mxu0 0.0
    %1803 = vmatprep.subr.mxu0 0.0
    %1804 = vmatpush1.msra.mxu0 0.0
    %1805 = vmatprep.subr.mxu0 0.0
    %1806 = vmatpush1.msra.mxu0 0.0
    %1807 = vmatprep.subr.mxu0 0.0
    %1808 = vmatpush1.msra.mxu0 0.0
    %1809 = vmatprep.subr.mxu0 0.0
    %1810 = vmatpush1.msra.mxu0 0.0
    %1811 = vmatprep.subr.mxu0 0.0
    %1812 = vmatpush1.msra.mxu0 0.0
    %1813 = vmatprep.subr.mxu0 0.0
    %1814 = vmatpush1.msra.mxu0 0.0
    %1815 = vmatprep.subr.mxu0 0.0
    %1816 = vmatpush1.msra.mxu0 0.0
    %1817 = vmatprep.subr.mxu0 0.0
    %1818 = vmatpush1.msra.mxu0 0.0
    %1819 = vmatprep.subr.mxu0 0.0
    %1820 = vmatpush1.msra.mxu0 0.0
    %1821 = vmatprep.subr.mxu0 0.0
    %1822 = vmatpush1.msra.mxu0 0.0
    %1823 = vmatprep.subr.mxu0 0.0
    %1824 = vmatpush1.msra.mxu0 0.0
    %1825 = vmatprep.subr.mxu0 0.0
    %1826 = vmatpush1.msra.mxu0 0.0
    %1827 = vmatprep.mubr.f32.mxu0 0.0
    %1828 = vmatmul.mubr.f32.gmra.mrb[0].mxu0 %v1690
    %v1829 = vpop.f32.mrb[0].mxu0
    %v1830 = vadd.f32 0.0, %v1829
    %v1831 = vpop.f32.mrb[0].mxu0
    %v1832 = vadd.f32 0.0, %v1831
    %1833 = vdwg.mxu0
    %v1838 = vrot.slane %v1759, 4
    %v1839 = vrot.slane %v1761, 4
    %v1840 = vrot.slane %v1830, 4
    %v1841 = vrot.slane %v1832, 4
    %v1846 = vadd.f32 %v286, %v1838
    %v1847 = vadd.f32 %v288, %v1839
    %v1848 = vadd.f32 %v363, %v1840
    %v1849 = vadd.f32 %v365, %v1841
    %v1850 = vxor.u32 %v1846, 2147483648
    %v1851 = vxor.u32 %v1847, 2147483648
    %v1852 = vxor.u32 %v1848, 2147483648
    %v1853 = vmul.f32 %v1850, 1.442695
    %v1854 = vpow.pop %v1853
    %v1855 = vmul.f32 %v1851, 1.442695
    %v1856 = vpow.pop %v1855
    %v1857 = vmul.f32 %v1852, 1.442695
    %v1858 = vpow.pop %v1857
    %v1859 = vadd.f32 %v1854, 1.0
    %v1860 = vadd.f32 %v1856, 1.0
    %v1861 = vadd.f32 %v1858, 1.0
    %v1862 = vrcp.pop %v1859
    %v1863 = vmul.f32 1.0, %v1862
    %v1864 = vrcp.pop %v1860
    %v1865 = vmul.f32 1.0, %v1864
    %v1866 = vrcp.pop %v1861
    %v1867 = vmul.f32 1.0, %v1866
    %v1868 = vtanh.pop %v1849
    %v1870 = vrot.slane %v1658, 6
    %v1872 = vmul.f32 %v1865, %v1870
    %v1873 = vmul.f32 %v1863, %v1868
    %v1874 = vadd.f32 %v1872, %v1873
    %v1875 = vtanh.pop %v1874
    %v1876 = vmul.f32 %v1867, %v1875
    %v1878 = vcombine.high %v1876, %v1876
    %v1880 = vunpack.c.l.s4 1966171168
    %v1881 = vunpack.c.0.s8 %v1880
    %v1882 = vlaneseq
    %v1883 = vshrl.u32 %v1882, 7
    %v1884 = vsub.s32 %v1881, %v1883
    %v1885 = vrot.slane %v1878, %v1884
    %v1886 = vcombine.high %v1885, %v1885
    %v1888 = vunpack.c.l.s4 1966171168
    %v1889 = vunpack.c.0.s8 %v1888
    %v1890 = vlaneseq
    %v1891 = vshrl.u32 %v1890, 7
    %v1892 = vsub.s32 %v1889, %v1891
    %v1893 = vrot.slane %v1885, %v1892
    %v1895 = vunpack.c.l.s4 1966171168
    %v1896 = vunpack.c.0.s8 %v1895
    %v1897 = vlaneseq
    %v1898 = vshrl.u32 %v1897, 7
    %v1899 = vsub.s32 %v1896, %v1898
    %v1900 = vrot.slane %v1886, %v1899
    %1903 = vst [vmem:[#allocation8 + $0x6] sm:$0x1] %v1893
    %1904 = vst [vmem:[#allocation8 + $0xe] sm:$0x1] %v1900
    %v1905 = vrot.slane %v1876, 4
    %1907 = vmatprep.subr.mxu0 %v368
    %1908 = vmatpush1.msra.mxu0 %v367
    %1909 = vmatprep.subr.mxu0 %v372
    %1910 = vmatpush1.msra.mxu0 %v371
    %1911 = vmatprep.subr.mxu0 %v376
    %1912 = vmatpush1.msra.mxu0 %v375
    %1913 = vmatprep.subr.mxu0 %v380
    %1914 = vmatpush1.msra.mxu0 %v379
    %1915 = vmatprep.subr.mxu0 %v384
    %1916 = vmatpush1.msra.mxu0 %v383
    %1917 = vmatprep.subr.mxu0 %v388
    %1918 = vmatpush1.msra.mxu0 %v387
    %1919 = vmatprep.subr.mxu0 %v392
    %1920 = vmatpush1.msra.mxu0 %v391
    %1921 = vmatprep.subr.mxu0 %v396
    %1922 = vmatpush1.msra.mxu0 %v395
    %1923 = vmatprep.subr.mxu0 %v400
    %1924 = vmatpush1.msra.mxu0 %v399
    %1925 = vmatprep.subr.mxu0 %v404
    %1926 = vmatpush1.msra.mxu0 %v403
    %1927 = vmatprep.subr.mxu0 %v408
    %1928 = vmatpush1.msra.mxu0 %v407
    %1929 = vmatprep.subr.mxu0 %v412
    %1930 = vmatpush1.msra.mxu0 %v411
    %1931 = vmatprep.subr.mxu0 %v416
    %1932 = vmatpush1.msra.mxu0 %v415
    %1933 = vmatprep.subr.mxu0 %v420
    %1934 = vmatpush1.msra.mxu0 %v419
    %1935 = vmatprep.subr.mxu0 %v424
    %1936 = vmatpush1.msra.mxu0 %v423
    %1937 = vmatprep.subr.mxu0 %v428
    %1938 = vmatpush1.msra.mxu0 %v427
    %1939 = vmatprep.subr.mxu0 0.0
    %1940 = vmatpush1.msra.mxu0 0.0
    %1941 = vmatprep.subr.mxu0 0.0
    %1942 = vmatpush1.msra.mxu0 0.0
    %1943 = vmatprep.subr.mxu0 0.0
    %1944 = vmatpush1.msra.mxu0 0.0
    %1945 = vmatprep.subr.mxu0 0.0
    %1946 = vmatpush1.msra.mxu0 0.0
    %1947 = vmatprep.subr.mxu0 0.0
    %1948 = vmatpush1.msra.mxu0 0.0
    %1949 = vmatprep.subr.mxu0 0.0
    %1950 = vmatpush1.msra.mxu0 0.0
    %1951 = vmatprep.subr.mxu0 0.0
    %1952 = vmatpush1.msra.mxu0 0.0
    %1953 = vmatprep.subr.mxu0 0.0
    %1954 = vmatpush1.msra.mxu0 0.0
    %1955 = vmatprep.subr.mxu0 0.0
    %1956 = vmatpush1.msra.mxu0 0.0
    %1957 = vmatprep.subr.mxu0 0.0
    %1958 = vmatpush1.msra.mxu0 0.0
    %1959 = vmatprep.subr.mxu0 0.0
    %1960 = vmatpush1.msra.mxu0 0.0
    %1961 = vmatprep.subr.mxu0 0.0
    %1962 = vmatpush1.msra.mxu0 0.0
    %1963 = vmatprep.subr.mxu0 0.0
    %1964 = vmatpush1.msra.mxu0 0.0
    %1965 = vmatprep.subr.mxu0 0.0
    %1966 = vmatpush1.msra.mxu0 0.0
    %1967 = vmatprep.subr.mxu0 0.0
    %1968 = vmatpush1.msra.mxu0 0.0
    %1969 = vmatprep.subr.mxu0 0.0
    %1970 = vmatpush1.msra.mxu0 0.0
    %1971 = vmatprep.mubr.f32.mxu0 0.0
    %1972 = vmatmul.mubr.f32.gmra.mrb[0].mxu0 %v1905
    %v1973 = vpop.f32.mrb[0].mxu0
    %v1974 = vadd.f32 0.0, %v1973
    %v1975 = vpop.f32.mrb[0].mxu0
    %v1976 = vadd.f32 0.0, %v1975
    %1977 = vdwg.mxu0
    %1978 = vmatprep.subr.mxu0 %v370
    %1979 = vmatpush1.msra.mxu0 %v369
    %1980 = vmatprep.subr.mxu0 %v374
    %1981 = vmatpush1.msra.mxu0 %v373
    %1982 = vmatprep.subr.mxu0 %v378
    %1983 = vmatpush1.msra.mxu0 %v377
    %1984 = vmatprep.subr.mxu0 %v382
    %1985 = vmatpush1.msra.mxu0 %v381
    %1986 = vmatprep.subr.mxu0 %v386
    %1987 = vmatpush1.msra.mxu0 %v385
    %1988 = vmatprep.subr.mxu0 %v390
    %1989 = vmatpush1.msra.mxu0 %v389
    %1990 = vmatprep.subr.mxu0 %v394
    %1991 = vmatpush1.msra.mxu0 %v393
    %1992 = vmatprep.subr.mxu0 %v398
    %1993 = vmatpush1.msra.mxu0 %v397
    %1994 = vmatprep.subr.mxu0 %v402
    %1995 = vmatpush1.msra.mxu0 %v401
    %1996 = vmatprep.subr.mxu0 %v406
    %1997 = vmatpush1.msra.mxu0 %v405
    %1998 = vmatprep.subr.mxu0 %v410
    %1999 = vmatpush1.msra.mxu0 %v409
    %2000 = vmatprep.subr.mxu0 %v414
    %2001 = vmatpush1.msra.mxu0 %v413
    %2002 = vmatprep.subr.mxu0 %v418
    %2003 = vmatpush1.msra.mxu0 %v417
    %2004 = vmatprep.subr.mxu0 %v422
    %2005 = vmatpush1.msra.mxu0 %v421
    %2006 = vmatprep.subr.mxu0 %v426
    %2007 = vmatpush1.msra.mxu0 %v425
    %2008 = vmatprep.subr.mxu0 %v430
    %2009 = vmatpush1.msra.mxu0 %v429
    %2010 = vmatprep.subr.mxu0 0.0
    %2011 = vmatpush1.msra.mxu0 0.0
    %2012 = vmatprep.subr.mxu0 0.0
    %2013 = vmatpush1.msra.mxu0 0.0
    %2014 = vmatprep.subr.mxu0 0.0
    %2015 = vmatpush1.msra.mxu0 0.0
    %2016 = vmatprep.subr.mxu0 0.0
    %2017 = vmatpush1.msra.mxu0 0.0
    %2018 = vmatprep.subr.mxu0 0.0
    %2019 = vmatpush1.msra.mxu0 0.0
    %2020 = vmatprep.subr.mxu0 0.0
    %2021 = vmatpush1.msra.mxu0 0.0
    %2022 = vmatprep.subr.mxu0 0.0
    %2023 = vmatpush1.msra.mxu0 0.0
    %2024 = vmatprep.subr.mxu0 0.0
    %2025 = vmatpush1.msra.mxu0 0.0
    %2026 = vmatprep.subr.mxu0 0.0
    %2027 = vmatpush1.msra.mxu0 0.0
    %2028 = vmatprep.subr.mxu0 0.0
    %2029 = vmatpush1.msra.mxu0 0.0
    %2030 = vmatprep.subr.mxu0 0.0
    %2031 = vmatpush1.msra.mxu0 0.0
    %2032 = vmatprep.subr.mxu0 0.0
    %2033 = vmatpush1.msra.mxu0 0.0
    %2034 = vmatprep.subr.mxu0 0.0
    %2035 = vmatpush1.msra.mxu0 0.0
    %2036 = vmatprep.subr.mxu0 0.0
    %2037 = vmatpush1.msra.mxu0 0.0
    %2038 = vmatprep.subr.mxu0 0.0
    %2039 = vmatpush1.msra.mxu0 0.0
    %2040 = vmatprep.subr.mxu0 0.0
    %2041 = vmatpush1.msra.mxu0 0.0
    %2042 = vmatprep.mubr.f32.mxu0 0.0
    %2043 = vmatmul.mubr.f32.gmra.mrb[0].mxu0 %v1905
    %v2044 = vpop.f32.mrb[0].mxu0
    %v2045 = vadd.f32 0.0, %v2044
    %v2046 = vpop.f32.mrb[0].mxu0
    %v2047 = vadd.f32 0.0, %v2046
    %2048 = vdwg.mxu0
    %v2053 = vrot.slane %v1974, 2
    %v2054 = vrot.slane %v1976, 2
    %v2055 = vrot.slane %v2045, 2
    %v2056 = vrot.slane %v2047, 2
    %v2061 = vadd.f32 %v286, %v2053
    %v2062 = vadd.f32 %v288, %v2054
    %v2063 = vadd.f32 %v363, %v2055
    %v2064 = vadd.f32 %v365, %v2056
    %v2065 = vxor.u32 %v2061, 2147483648
    %v2066 = vxor.u32 %v2062, 2147483648
    %v2067 = vxor.u32 %v2063, 2147483648
    %v2068 = vmul.f32 %v2065, 1.442695
    %v2069 = vpow.pop %v2068
    %v2070 = vmul.f32 %v2066, 1.442695
    %v2071 = vpow.pop %v2070
    %v2072 = vmul.f32 %v2067, 1.442695
    %v2073 = vpow.pop %v2072
    %v2074 = vadd.f32 %v2069, 1.0
    %v2075 = vadd.f32 %v2071, 1.0
    %v2076 = vadd.f32 %v2073, 1.0
    %v2077 = vrcp.pop %v2074
    %v2078 = vmul.f32 1.0, %v2077
    %v2079 = vrcp.pop %v2075
    %v2080 = vmul.f32 1.0, %v2079
    %v2081 = vrcp.pop %v2076
    %v2082 = vmul.f32 1.0, %v2081
    %v2083 = vtanh.pop %v2064
    %v2085 = vrot.slane %v1874, 6
    %v2087 = vmul.f32 %v2080, %v2085
    %v2088 = vmul.f32 %v2078, %v2083
    %v2089 = vadd.f32 %v2087, %v2088
    %v2090 = vtanh.pop %v2089
    %v2091 = vmul.f32 %v2082, %v2090
    %v2093 = vcombine.high %v2091, %v2091
    %v2095 = vunpack.c.l.s4 1966171168
    %v2096 = vunpack.c.0.s8 %v2095
    %v2097 = vlaneseq
    %v2098 = vshrl.u32 %v2097, 7
    %v2099 = vsub.s32 %v2096, %v2098
    %v2100 = vrot.slane %v2093, %v2099
    %v2101 = vcombine.high %v2100, %v2100
    %v2103 = vunpack.c.l.s4 1966171168
    %v2104 = vunpack.c.0.s8 %v2103
    %v2105 = vlaneseq
    %v2106 = vshrl.u32 %v2105, 7
    %v2107 = vsub.s32 %v2104, %v2106
    %v2108 = vrot.slane %v2100, %v2107
    %v2110 = vunpack.c.l.s4 1966171168
    %v2111 = vunpack.c.0.s8 %v2110
    %v2112 = vlaneseq
    %v2113 = vshrl.u32 %v2112, 7
    %v2114 = vsub.s32 %v2111, %v2113
    %v2115 = vrot.slane %v2101, %v2114
    %v2116 = vcombine.high %v2108, %v2108
    %v2117 = vcombine.high %v2115, %v2115
    %2120 = vst [vmem:[#allocation8 + $0x7] sm:$0x1] %v2116
    %2121 = vst [vmem:[#allocation8 + $0xf] sm:$0x1] %v2117
    // Predicated region
    $region30: #{tpu_custom_call.1} parent=1 // pred_check
      _
    $region31: #{tpu_custom_call.1} parent=1 // pred_check_branch
      %2123 = sbr.rel (0) target = $region33
    $region32: #{tpu_custom_call.1} parent=1 // pred_region
      %s2125 = ssub.s32 256, 256
      %2126 = vsyncadd [#allocation4], %s2125
      %s2127 = sshll.u32 [#allocation8], 4
      %s2128 = int_to_ptr.vmem [resolvable:$true] %s2127
      %2133 = dma.vmem_to_hbm [thread:$0]  %s2128, 256, %s4, [#allocation4], 128, 128, 8
    $region33: #{tpu_custom_call.1} parent=1 // pred_fallthru
      _
    // Predicated region
    $region34: #{tpu_custom_call.1} parent=1 // pred_check
      _
    $region35: #{tpu_custom_call.1} parent=1 // pred_check_branch
      %2135 = sbr.rel (0) target = $region37
    $region36: #{tpu_custom_call.1} parent=1 // pred_region
      %2136 = dma.done [#allocation4], 256
    $region37: #{tpu_custom_call.1} parent=1 // pred_fallthru
      _
    %2137 = vsyncpa [#allocation3], 1
    %2138 = vsyncpa [#allocation6], 1
    %2139 = vsyncpa [#allocation4], 1

</llo_original>
